<compile_context>
chip_gen: v7x
topology: tpu7x:2x2x1
jax: 0.10.0
libtpu: 0.0.40
codegen_flags: <defaults>
</compile_context>

<pallas_src>
import math
from collections import namedtuple

import jax
import jax.numpy as jnp
from jax.experimental import pallas as pl
from jax.experimental.pallas import tpu as pltpu

MONOTONIC_CONST = 1e-3
START_VAL = 0.0
END_VAL = 1.0
NON_COND_DIM = 0
BISECT_EPS = 1e-3      # bisection_search default eps
BISECT_ITERS = 21      # n_iter=20 -> at most 21 bisection queries
LANES = 128            # vreg lane width

# Full-f32 matmul passes on the MXU (validated to lower + pass the tolerance).
_MM_PREC = jax.lax.Precision.HIGHEST


def _dot(a, b):
    return jnp.dot(a, b, preferred_element_type=jnp.float32, precision=_MM_PREC)


def _sigmoid(x):
    # logistic(x) == 0.5*tanh(0.5*x)+0.5: one EUP tanh, no f32 divide.
    return 0.5 * jnp.tanh(0.5 * x) + 0.5


# ---------------------------------------------------------------------------
# Shared in-kernel network tail (layer-1 preact -> ... -> replicated scalar out)
# ---------------------------------------------------------------------------
def _net_tail(pre1, mids, w_last, b_last):
    """sigmoid(pre1) -> middle PositiveLinear+Sigmoid layers -> last layer + Sigmoid.

    All arrays are lane-packed: 4 samples per row, 32 lanes per sample block;
    the last layer's weights are replicated so the output stays (rows, 128)."""
    y = _sigmoid(pre1)
    for (w, b) in mids:
        y = _sigmoid(_dot(y, w) + b)
    return _sigmoid(_dot(y, w_last) + b_last)


def _unpack(rest):
    *arrs, out_ref = rest
    sel_e = arrs[-2][...]      # (pack*d, 128): packed x -> NC value replicated per block
    w1nc = arrs[-1][...]       # (1, 128): layer-1 row of the non-conditional input, tiled
    wb = arrs[:-2]
    params = [(wb[2 * i][...], wb[2 * i + 1][...]) for i in range(len(wb) // 2)]
    return params, sel_e, w1nc, out_ref


# ---------------------------------------------------------------------------
# Kernel 1: F(x)  ==  (apply_layers(x) - y_start) / (y_end - y_start)
# ---------------------------------------------------------------------------
def _cdf_kernel(x_ref, *rest):
    params, sel_e, w1nc, out_ref = _unpack(rest)
    (w1, b1), mids, (wl, bl) = params[0], params[1:-1], params[-1]

    x = x_ref[...]                                       # (tm, pack*d)
    tm = x.shape[0]

    base1 = _dot(x, w1) + b1                             # layer-1 preact (incl. NC dim)
    xnc = _dot(x, sel_e)                                 # searched-dim value, lane-replicated
    t = xnc * w1nc                                       # its layer-1 contribution

    # x / start_(x) / end_(x) share base1; only the NC contribution changes.
    pre = jnp.concatenate(
        [base1,                                          # x itself
         base1 - t + START_VAL * w1nc,                   # start_(x)
         base1 - t + END_VAL * w1nc], axis=0)            # end_(x)
    y = _net_tail(pre, mids, wl, bl)                     # (3*tm, 128)

    yx = y[0 * tm:1 * tm] + MONOTONIC_CONST * xnc
    ys = y[1 * tm:2 * tm] + MONOTONIC_CONST * START_VAL
    ye = y[2 * tm:3 * tm] + MONOTONIC_CONST * END_VAL
    out_ref[...] = (yx - ys) / (ye - ys)                 # scale(); lane-dense slab


# ---------------------------------------------------------------------------
# Kernel 2: F_inv(z | given_x)  ==  MonotonicInverse.forward (bisection on F)
# ---------------------------------------------------------------------------
def _finv_kernel(z_ref, gx_ref, *rest):
    params, sel_e, w1nc, out_ref = _unpack(rest)
    (w1, b1), mids, (wl, bl) = params[0], params[1:-1], params[-1]

    gx = gx_ref[...]                                     # (tm, pack*d)
    z = z_ref[...]                                       # target CDF, lane-replicated (tm,128)
    tm = gx.shape[0]

    # Layer-1 preact with the searched (non-conditional) dim removed; per query it is
    # rebuilt as base1 + mid * w1nc (rank-1 VPU update, no per-iteration MXU/mask).
    base1 = _dot(gx, w1) + b1 - _dot(gx, sel_e) * w1nc

    # F at start_/end_ of the query in one stacked chain, then fold the CDF scale into
    # the target:  |(raw-ys)/(ye-ys) - z| < eps  <=>  |raw - z_raw| < eps*(ye-ys).
    y_se = _net_tail(jnp.concatenate([base1 + START_VAL * w1nc,
                                      base1 + END_VAL * w1nc], axis=0), mids, wl, bl)
    ys = y_se[:tm] + MONOTONIC_CONST * START_VAL
    ye = y_se[tm:] + MONOTONIC_CONST * END_VAL
    den = ye - ys                                        # > 0 (monotonic_const)
    z_raw = ys + z * den
    eps_raw = BISECT_EPS * den

    lo0 = jnp.full_like(z, START_VAL)
    hi0 = jnp.full_like(z, END_VAL)
    done0 = jnp.zeros(z.shape, dtype=jnp.bool_)

    def body(_, carry):
        lo, hi, done = carry
        mid = (lo + hi) * 0.5
        raw = _net_tail(base1 + mid * w1nc, mids, wl, bl) + MONOTONIC_CONST * mid
        new_done = done | (jnp.abs(raw - z_raw) < eps_raw)
        go_hi = raw > z_raw                              # F(mid) > z -> shrink end
        lo = jnp.where(new_done | go_hi, lo, mid)        # fused selects, no `ans` carry
        hi = jnp.where(new_done | (~go_hi), hi, mid)
        return lo, hi, new_done

    lo, hi, _ = jax.lax.fori_loop(0, BISECT_ITERS, body, (lo0, hi0, done0), unroll=3)
    out_ref[...] = (lo + hi) * 0.5                       # == frozen converged midpoint


# ---------------------------------------------------------------------------
# Parameter packing (host side, once)
# ---------------------------------------------------------------------------
Packed = namedtuple("Packed", ["arrays", "pack", "rep", "d"])


def pack_params(params, non_conditional_dim=NON_COND_DIM, lanes=LANES):
    """exp + transpose + block-diagonal lane packing of `pack = 128/hidden` samples.

    The final (out_features == 1) layer is replicated across its lane block so the
    CDF value stays lane-dense end to end."""
    d = params[0][0].shape[1]
    h = params[0][0].shape[0]
    assert lanes % h == 0, "hidden width must divide 128 for lane packing"
    for (pre_w, _) in params[1:-1]:
        assert pre_w.shape == (h, h), "middle layers must be hidden x hidden"
    assert params[-1][0].shape == (1, h), "final layer must map hidden -> 1"
    pack, rep = lanes // h, h

    arrays = []
    last = len(params) - 1
    eye_p = jnp.eye(pack, dtype=jnp.float32)
    for li, (pre_w, b) in enumerate(params):
        w = jnp.exp(pre_w.astype(jnp.float32)).T                # (in, out)
        bb = b.astype(jnp.float32).reshape(1, -1)
        if li == last:
            w = jnp.tile(w, (1, rep))                           # replicate scalar output
            bb = jnp.tile(bb, (1, rep))
        arrays.append(jnp.kron(eye_p, w))                       # block-diagonal
        arrays.append(jnp.tile(bb, (1, pack)))

    # Selector: packed input (rows, pack*d) -> non-conditional value replicated per block.
    sel = jnp.zeros((d, rep), jnp.float32).at[non_conditional_dim, :].set(1.0)
    arrays.append(jnp.kron(eye_p, sel))                         # (pack*d, 128)
    # Layer-1 row of the non-conditional input, tiled across blocks.
    w1_t = jnp.exp(params[0][0].astype(jnp.float32)).T          # (d, h)
    arrays.append(jnp.tile(
        w1_t[non_conditional_dim:non_conditional_dim + 1, :], (1, pack)))  # (1, 128)
    return Packed(arrays=arrays, pack=pack, rep=rep, d=d)


# ---------------------------------------------------------------------------
# Wrappers
# ---------------------------------------------------------------------------
def _param_specs(arrs):
    # KB-scale constant-index VMEM blocks (full arrays).
    return [pl.BlockSpec(a.shape, lambda i: (0, 0)) for a in arrs]


def _pick_tile(n_rows, tm):
    """Packed-row tile: multiple of 8 sublanes; prefer >=2 grid steps so the
    ("parallel",) grid can be sharded across v7x's two TensorCores."""
    n8 = ((n_rows + 7) // 8) * 8
    tm_eff = ((min(tm, n8) + 7) // 8) * 8
    if n8 > 8 and n8 // tm_eff < 2:
        tm_eff = ((n8 // 2 + 7) // 8) * 8
    rows_pad = ((n_rows + tm_eff - 1) // tm_eff) * tm_eff
    return tm_eff, rows_pad


def _pad_and_pack(a, rows_pad, pack):
    n, c = a.shape
    total = rows_pad * pack
    if total != n:
        a = jnp.concatenate([a, jnp.zeros((total - n, c), a.dtype)], axis=0)
    return a.reshape(rows_pad, pack * c)


def model_cdf(x, pp, tm=512):
    """F(x).  tm = packed rows per grid step (each packed row = pp.pack samples)."""
    n, d = x.shape
    assert d == pp.d
    lanes = pp.pack * pp.rep
    n_rows = -(-n // pp.pack)
    tm_eff, rows_pad = _pick_tile(n_rows, tm)
    xp = _pad_and_pack(x.astype(jnp.float32), rows_pad, pp.pack)
    out = pl.pallas_call(
        _cdf_kernel,
        out_shape=jax.ShapeDtypeStruct((rows_pad, lanes), jnp.float32),
        grid=(rows_pad // tm_eff,),
        in_specs=[pl.BlockSpec((tm_eff, pp.pack * d), lambda i: (i, 0))]
                 + _param_specs(pp.arrays),
        out_specs=pl.BlockSpec((tm_eff, lanes), lambda i: (i, 0)),
        compiler_params=pltpu.CompilerParams(dimension_semantics=("parallel",)),
    )(xp, *pp.arrays)
    # Each 32-lane block holds one sample's CDF value replicated; take lane 0 per block.
    return out[:, ::pp.rep].reshape(rows_pad * pp.pack, 1)[:n]


def model_f_inv(z, given_x, pp, tm=64):
    """F_inv(z | given_x) via in-kernel bisection.  Small tile keeps the 21-iteration
    loop's carried state (base1/z_raw/eps_raw/lo/hi/done) near the 64-vreg file."""
    n, d = given_x.shape
    assert d == pp.d and z.shape == (n, 1)
    lanes = pp.pack * pp.rep
    n_rows = -(-n // pp.pack)
    tm_eff, rows_pad = _pick_tile(n_rows, tm)
    gxp = _pad_and_pack(given_x.astype(jnp.float32), rows_pad, pp.pack)
    zp = _pad_and_pack(z.astype(jnp.float32), rows_pad, pp.pack)     # (rows, pack)
    zp = jnp.repeat(zp, pp.rep, axis=1)                              # lane-dense target
    out = pl.pallas_call(
        _finv_kernel,
        out_shape=jax.ShapeDtypeStruct((rows_pad, lanes), jnp.float32),
        grid=(rows_pad // tm_eff,),
        in_specs=[pl.BlockSpec((tm_eff, lanes), lambda i: (i, 0)),
                  pl.BlockSpec((tm_eff, pp.pack * d), lambda i: (i, 0))]
                 + _param_specs(pp.arrays),
        out_specs=pl.BlockSpec((tm_eff, lanes), lambda i: (i, 0)),
        compiler_params=pltpu.CompilerParams(dimension_semantics=("parallel",)),
    )(zp, gxp, *pp.arrays)
    return out[:, ::pp.rep].reshape(rows_pad * pp.pack, 1)[:n]


# ---------------------------------------------------------------------------
# Deterministic parameter init (mirrors PositiveLinear.__init__ with 'exp')
# ---------------------------------------------------------------------------
def init_params(key, arch):
    params = []
    for (a1, a2) in zip(arch[:-1], arch[1:]):
        key, k1, k2 = jax.random.split(key, 3)
        init_min = math.log(0.01)
        init_max = math.log(math.sqrt(1.0 / a1))
        pre_w = jax.random.uniform(k1, (a2, a1), jnp.float32) * (init_max - init_min) + init_min
        scale = 1.0 / a1
        bias = jax.random.uniform(k2, (a2,), jnp.float32) * 2.0 * scale - scale
        params.append((pre_w, bias))
    return params


# ---------------------------------------------------------------------------
# Pure-JAX reference (correctness check only; same matmul precision)
# ---------------------------------------------------------------------------
def _ref_apply_layers(x, params):
    y = x
    for (pre_w, b) in params:
        y = jax.nn.sigmoid(jnp.dot(y, jnp.exp(pre_w).T, precision=_MM_PREC) + b)
    return y + MONOTONIC_CONST * x[:, NON_COND_DIM:NON_COND_DIM + 1]


def _ref_cdf(x, params):
    xs = x.at[:, NON_COND_DIM].set(START_VAL)
    xe = x.at[:, NON_COND_DIM].set(END_VAL)
    y, ys, ye = (_ref_apply_layers(v, params) for v in (x, xs, xe))
    return (y - ys) / (ye - ys)


if __name__ == "__main__":
    key = jax.random.PRNGKey(0)
    kp, kx, kz = jax.random.split(key, 3)

    arch = [4, 32, 32, 1]          # d=4, two hidden PositiveLinear+Sigmoid, final exp layer
    params = init_params(kp, arch)
    pp = pack_params(params)        # exp'd, transposed, lane-packed once; shared by both kernels

    n, d = 16, arch[0]
    x = jax.random.uniform(kx, (n, d), dtype=jnp.float32)

    # CDF forward: F(x)
    cdf = model_cdf(x, pp)
    jax.block_until_ready(cdf)
    ref = _ref_cdf(x, params)
    assert cdf.shape == (n, 1)
    err = float(jnp.max(jnp.abs(cdf - ref)))
    assert err < 2e-3, f"cdf mismatch vs reference: max abs err {err}"

    # Inverse CDF: F_inv(z | given_x) via in-kernel bisection
    z = jax.random.uniform(kz, (n, 1), dtype=jnp.float32)
    inv = model_f_inv(z, x, pp)
    jax.block_until_ready(inv)
    assert inv.shape == (n, 1)
    # sanity: plugging the inverse back through F reproduces z (within bisection eps)
    x_rec = x.at[:, NON_COND_DIM].set(inv[:, 0])
    z_rec = _ref_cdf(x_rec, params)
    assert float(jnp.max(jnp.abs(z_rec - z))) < 5e-3, "bisection inverse did not converge"

    print("KERNEL_OK")
</pallas_src>

<mosaic_0001>
module attributes {stable_mosaic.version = 11 : i64} {
  func.func @_cdf_kernel(%arg0: i32, %arg1: memref<8x16xf32, #tpu.memory_space<vmem>>, %arg2: memref<16x128xf32, #tpu.memory_space<vmem>>, %arg3: memref<1x128xf32, #tpu.memory_space<vmem>>, %arg4: memref<128x128xf32, #tpu.memory_space<vmem>>, %arg5: memref<1x128xf32, #tpu.memory_space<vmem>>, %arg6: memref<128x128xf32, #tpu.memory_space<vmem>>, %arg7: memref<1x128xf32, #tpu.memory_space<vmem>>, %arg8: memref<16x128xf32, #tpu.memory_space<vmem>>, %arg9: memref<1x128xf32, #tpu.memory_space<vmem>>, %arg10: memref<8x128xf32, #tpu.memory_space<vmem>>) attributes {dimension_semantics = [#tpu.dimension_semantics<parallel>], iteration_bounds = array<i64: 1>, scalar_prefetch = 0 : i64, scratch_operands = 0 : i64, tpu.core_type = #tpu.core_type<tc>, window_params = [{transform_indices = @transform_0, window_bounds = array<i64: 8, 16>}, {pipeline_mode = #tpu.pipeline_mode<synchronous>, transform_indices = @transform_1, window_bounds = array<i64: 16, 128>}, {pipeline_mode = #tpu.pipeline_mode<synchronous>, transform_indices = @transform_2, window_bounds = array<i64: 1, 128>}, {pipeline_mode = #tpu.pipeline_mode<synchronous>, transform_indices = @transform_3, window_bounds = array<i64: 128, 128>}, {pipeline_mode = #tpu.pipeline_mode<synchronous>, transform_indices = @transform_4, window_bounds = array<i64: 1, 128>}, {pipeline_mode = #tpu.pipeline_mode<synchronous>, transform_indices = @transform_5, window_bounds = array<i64: 128, 128>}, {pipeline_mode = #tpu.pipeline_mode<synchronous>, transform_indices = @transform_6, window_bounds = array<i64: 1, 128>}, {pipeline_mode = #tpu.pipeline_mode<synchronous>, transform_indices = @transform_7, window_bounds = array<i64: 16, 128>}, {pipeline_mode = #tpu.pipeline_mode<synchronous>, transform_indices = @transform_8, window_bounds = array<i64: 1, 128>}, {transform_indices = @transform_9, window_bounds = array<i64: 8, 128>}]} {
    %c0 = arith.constant 0 : index
    %c0_0 = arith.constant 0 : index
    %0 = vector.load %arg8[%c0, %c0_0] : memref<16x128xf32, #tpu.memory_space<vmem>>, vector<16x128xf32>
    %c0_1 = arith.constant 0 : index
    %c0_2 = arith.constant 0 : index
    %1 = vector.load %arg9[%c0_1, %c0_2] : memref<1x128xf32, #tpu.memory_space<vmem>>, vector<1x128xf32>
    %c0_3 = arith.constant 0 : index
    %c0_4 = arith.constant 0 : index
    %2 = vector.load %arg2[%c0_3, %c0_4] : memref<16x128xf32, #tpu.memory_space<vmem>>, vector<16x128xf32>
    %c0_5 = arith.constant 0 : index
    %c0_6 = arith.constant 0 : index
    %3 = vector.load %arg3[%c0_5, %c0_6] : memref<1x128xf32, #tpu.memory_space<vmem>>, vector<1x128xf32>
    %c0_7 = arith.constant 0 : index
    %c0_8 = arith.constant 0 : index
    %4 = vector.load %arg4[%c0_7, %c0_8] : memref<128x128xf32, #tpu.memory_space<vmem>>, vector<128x128xf32>
    %c0_9 = arith.constant 0 : index
    %c0_10 = arith.constant 0 : index
    %5 = vector.load %arg5[%c0_9, %c0_10] : memref<1x128xf32, #tpu.memory_space<vmem>>, vector<1x128xf32>
    %c0_11 = arith.constant 0 : index
    %c0_12 = arith.constant 0 : index
    %6 = vector.load %arg6[%c0_11, %c0_12] : memref<128x128xf32, #tpu.memory_space<vmem>>, vector<128x128xf32>
    %c0_13 = arith.constant 0 : index
    %c0_14 = arith.constant 0 : index
    %7 = vector.load %arg7[%c0_13, %c0_14] : memref<1x128xf32, #tpu.memory_space<vmem>>, vector<1x128xf32>
    %c0_15 = arith.constant 0 : index
    %c0_16 = arith.constant 0 : index
    %8 = vector.load %arg1[%c0_15, %c0_16] : memref<8x16xf32, #tpu.memory_space<vmem>>, vector<8x16xf32>
    %cst = arith.constant dense<0.000000e+00> : vector<8x128xf32>
    %9 = tpu.matmul %8, %2, %cst {dimension_numbers = #tpu.dot_dimension_numbers<[1], [0], [0], [1], [0, 0, 1, 1], [], []>, precision = #tpu.contract_precision<fp32>} : vector<8x16xf32>, vector<16x128xf32>, vector<8x128xf32> -> vector<8x128xf32>
    %10 = vector.broadcast %3 : vector<1x128xf32> to vector<8x128xf32>
    %11 = arith.addf %9, %10 : vector<8x128xf32>
    %cst_17 = arith.constant dense<0.000000e+00> : vector<8x128xf32>
    %12 = tpu.matmul %8, %0, %cst_17 {dimension_numbers = #tpu.dot_dimension_numbers<[1], [0], [0], [1], [0, 0, 1, 1], [], []>, precision = #tpu.contract_precision<fp32>} : vector<8x16xf32>, vector<16x128xf32>, vector<8x128xf32> -> vector<8x128xf32>
    %13 = vector.broadcast %1 : vector<1x128xf32> to vector<8x128xf32>
    %14 = arith.mulf %12, %13 : vector<8x128xf32>
    %15 = arith.subf %11, %14 : vector<8x128xf32>
    %cst_18 = arith.constant 0.000000e+00 : f32
    %16 = vector.broadcast %cst_18 : f32 to vector<1x128xf32>
    %17 = arith.mulf %16, %1 : vector<1x128xf32>
    %18 = vector.broadcast %17 : vector<1x128xf32> to vector<8x128xf32>
    %19 = arith.addf %15, %18 : vector<8x128xf32>
    %20 = arith.subf %11, %14 : vector<8x128xf32>
    %cst_19 = arith.constant 1.000000e+00 : f32
    %21 = vector.broadcast %cst_19 : f32 to vector<1x128xf32>
    %22 = arith.mulf %21, %1 : vector<1x128xf32>
    %23 = vector.broadcast %22 : vector<1x128xf32> to vector<8x128xf32>
    %24 = arith.addf %20, %23 : vector<8x128xf32>
    %25 = tpu.concatenate %11, %19, %24 in 0 : vector<8x128xf32>, vector<8x128xf32>, vector<8x128xf32> -> vector<24x128xf32>
    %cst_20 = arith.constant 5.000000e-01 : f32
    %26 = vector.broadcast %cst_20 : f32 to vector<24x128xf32>
    %27 = arith.mulf %26, %25 : vector<24x128xf32>
    %28 = math.tanh %27 : vector<24x128xf32>
    %cst_21 = arith.constant 5.000000e-01 : f32
    %29 = vector.broadcast %cst_21 : f32 to vector<24x128xf32>
    %30 = arith.mulf %29, %28 : vector<24x128xf32>
    %cst_22 = arith.constant 5.000000e-01 : f32
    %31 = vector.broadcast %cst_22 : f32 to vector<24x128xf32>
    %32 = arith.addf %30, %31 : vector<24x128xf32>
    %cst_23 = arith.constant dense<0.000000e+00> : vector<24x128xf32>
    %33 = tpu.matmul %32, %4, %cst_23 {dimension_numbers = #tpu.dot_dimension_numbers<[1], [0], [0], [1], [0, 0, 1, 1], [], []>, precision = #tpu.contract_precision<fp32>} : vector<24x128xf32>, vector<128x128xf32>, vector<24x128xf32> -> vector<24x128xf32>
    %34 = vector.broadcast %5 : vector<1x128xf32> to vector<24x128xf32>
    %35 = arith.addf %33, %34 : vector<24x128xf32>
    %cst_24 = arith.constant 5.000000e-01 : f32
    %36 = vector.broadcast %cst_24 : f32 to vector<24x128xf32>
    %37 = arith.mulf %36, %35 : vector<24x128xf32>
    %38 = math.tanh %37 : vector<24x128xf32>
    %cst_25 = arith.constant 5.000000e-01 : f32
    %39 = vector.broadcast %cst_25 : f32 to vector<24x128xf32>
    %40 = arith.mulf %39, %38 : vector<24x128xf32>
    %cst_26 = arith.constant 5.000000e-01 : f32
    %41 = vector.broadcast %cst_26 : f32 to vector<24x128xf32>
    %42 = arith.addf %40, %41 : vector<24x128xf32>
    %cst_27 = arith.constant dense<0.000000e+00> : vector<24x128xf32>
    %43 = tpu.matmul %42, %6, %cst_27 {dimension_numbers = #tpu.dot_dimension_numbers<[1], [0], [0], [1], [0, 0, 1, 1], [], []>, precision = #tpu.contract_precision<fp32>} : vector<24x128xf32>, vector<128x128xf32>, vector<24x128xf32> -> vector<24x128xf32>
    %44 = vector.broadcast %7 : vector<1x128xf32> to vector<24x128xf32>
    %45 = arith.addf %43, %44 : vector<24x128xf32>
    %cst_28 = arith.constant 5.000000e-01 : f32
    %46 = vector.broadcast %cst_28 : f32 to vector<24x128xf32>
    %47 = arith.mulf %46, %45 : vector<24x128xf32>
    %48 = math.tanh %47 : vector<24x128xf32>
    %cst_29 = arith.constant 5.000000e-01 : f32
    %49 = vector.broadcast %cst_29 : f32 to vector<24x128xf32>
    %50 = arith.mulf %49, %48 : vector<24x128xf32>
    %cst_30 = arith.constant 5.000000e-01 : f32
    %51 = vector.broadcast %cst_30 : f32 to vector<24x128xf32>
    %52 = arith.addf %50, %51 : vector<24x128xf32>
    %53 = vector.extract_strided_slice %52 {offsets = [0, 0], sizes = [8, 128], strides = [1, 1]} : vector<24x128xf32> to vector<8x128xf32>
    %cst_31 = arith.constant 1.000000e-03 : f32
    %54 = vector.broadcast %cst_31 : f32 to vector<8x128xf32>
    %55 = arith.mulf %54, %12 : vector<8x128xf32>
    %56 = arith.addf %53, %55 : vector<8x128xf32>
    %57 = vector.extract_strided_slice %52 {offsets = [8, 0], sizes = [8, 128], strides = [1, 1]} : vector<24x128xf32> to vector<8x128xf32>
    %cst_32 = arith.constant 0.000000e+00 : f32
    %58 = vector.broadcast %cst_32 : f32 to vector<8x128xf32>
    %59 = arith.addf %57, %58 : vector<8x128xf32>
    %60 = vector.extract_strided_slice %52 {offsets = [16, 0], sizes = [8, 128], strides = [1, 1]} : vector<24x128xf32> to vector<8x128xf32>
    %cst_33 = arith.constant 1.000000e-03 : f32
    %61 = vector.broadcast %cst_33 : f32 to vector<8x128xf32>
    %62 = arith.addf %60, %61 : vector<8x128xf32>
    %63 = arith.subf %56, %59 : vector<8x128xf32>
    %64 = arith.subf %62, %59 : vector<8x128xf32>
    %65 = arith.divf %63, %64 : vector<8x128xf32>
    %c0_34 = arith.constant 0 : index
    %c0_35 = arith.constant 0 : index
    %66 = vector.load %arg10[%c0_34, %c0_35] : memref<8x128xf32, #tpu.memory_space<vmem>>, vector<8x128xf32>
    tpu.vector_store %arg10[%c0_34, %c0_35], %65 {strides = array<i32>} : memref<8x128xf32, #tpu.memory_space<vmem>>, vector<8x128xf32>,
    return
  }
  func.func @transform_0(%arg0: i32) -> (i32, i32) {
    %c0_i32 = arith.constant 0 : i32
    %c0_i32_0 = arith.constant 0 : i32
    return %arg0, %c0_i32 : i32, i32
  }
  func.func @transform_1(%arg0: i32) -> (i32, i32) {
    %c0_i32 = arith.constant 0 : i32
    %c0_i32_0 = arith.constant 0 : i32
    %c0_i32_1 = arith.constant 0 : i32
    return %c0_i32, %c0_i32_0 : i32, i32
  }
  func.func @transform_2(%arg0: i32) -> (i32, i32) {
    %c0_i32 = arith.constant 0 : i32
    %c0_i32_0 = arith.constant 0 : i32
    %c0_i32_1 = arith.constant 0 : i32
    return %c0_i32, %c0_i32_0 : i32, i32
  }
  func.func @transform_3(%arg0: i32) -> (i32, i32) {
    %c0_i32 = arith.constant 0 : i32
    %c0_i32_0 = arith.constant 0 : i32
    %c0_i32_1 = arith.constant 0 : i32
    return %c0_i32, %c0_i32_0 : i32, i32
  }
  func.func @transform_4(%arg0: i32) -> (i32, i32) {
    %c0_i32 = arith.constant 0 : i32
    %c0_i32_0 = arith.constant 0 : i32
    %c0_i32_1 = arith.constant 0 : i32
    return %c0_i32, %c0_i32_0 : i32, i32
  }
  func.func @transform_5(%arg0: i32) -> (i32, i32) {
    %c0_i32 = arith.constant 0 : i32
    %c0_i32_0 = arith.constant 0 : i32
    %c0_i32_1 = arith.constant 0 : i32
    return %c0_i32, %c0_i32_0 : i32, i32
  }
  func.func @transform_6(%arg0: i32) -> (i32, i32) {
    %c0_i32 = arith.constant 0 : i32
    %c0_i32_0 = arith.constant 0 : i32
    %c0_i32_1 = arith.constant 0 : i32
    return %c0_i32, %c0_i32_0 : i32, i32
  }
  func.func @transform_7(%arg0: i32) -> (i32, i32) {
    %c0_i32 = arith.constant 0 : i32
    %c0_i32_0 = arith.constant 0 : i32
    %c0_i32_1 = arith.constant 0 : i32
    return %c0_i32, %c0_i32_0 : i32, i32
  }
  func.func @transform_8(%arg0: i32) -> (i32, i32) {
    %c0_i32 = arith.constant 0 : i32
    %c0_i32_0 = arith.constant 0 : i32
    %c0_i32_1 = arith.constant 0 : i32
    return %c0_i32, %c0_i32_0 : i32, i32
  }
  func.func @transform_9(%arg0: i32) -> (i32, i32) {
    %c0_i32 = arith.constant 0 : i32
    %c0_i32_0 = arith.constant 0 : i32
    return %arg0, %c0_i32 : i32, i32
  }
}

</mosaic_0001>

<llo_original>
// kernel: tpu_custom_call.1
$region0: #{tpu_custom_call.1}
  #allocation0 [shape = 'u32[]', space=smem, size = 0x4, offset = 0x4, fixed_abs, tag = 'smem constant byte address 0x4 - core index']
  #allocation1 [shape = 'u32[144,128]{1,0:T(1,128)}', space=vmem, size = 0x12000, scoped, tag = 'internal scratch']
  %s0 = inlined_call_operand.hbm [shape: f32[8,16], index: 0, kind: input, shape index: {}]
  %s1 = inlined_call_operand.hbm [shape: f32[16,128], index: 1, kind: input, shape index: {}]
  %s2 = inlined_call_operand.vmem [shape: f32[1,128], index: 2, kind: input, shape index: {}]
  %s3 = inlined_call_operand.hbm [shape: f32[128,128], index: 3, kind: input, shape index: {}]
  %s4 = inlined_call_operand.vmem [shape: f32[1,128], index: 4, kind: input, shape index: {}]
  %s5 = inlined_call_operand.hbm [shape: f32[128,128], index: 5, kind: input, shape index: {}]
  %s6 = inlined_call_operand.vmem [shape: f32[1,128], index: 6, kind: input, shape index: {}]
  %s7 = inlined_call_operand.vmem [shape: f32[16,128], index: 7, kind: input, shape index: {}]
  %s8 = inlined_call_operand.vmem [shape: f32[1,128], index: 8, kind: input, shape index: {}]
  %s9 = inlined_call_operand.hbm [shape: f32[8,128], index: 9, kind: output, shape index: {}]
  %s10 = sld [smem:[#allocation0]]
  $region62: #{tpu_custom_call.1} parent=0
    _
  %s12 = ssub.s32 1, %s10
  %s13 = scalar_select 0, %s12, %s10
  $region1: #{tpu_custom_call.1} parent=0
    #allocation2 [shape = 'u8[4096]{0}', space=vmem, size = 0x1000, scoped, tag = 'input window, operand 0, single buffered']
    #allocation3 [shape = 's32[1]{0}', space=sflag, size = 0x4, scoped, tag = 'scoped memory for tpu_custom_call.1']
    #allocation4 [shape = 's32[1]{0}', space=sflag, size = 0x4, scoped, tag = 'scoped memory for tpu_custom_call.1']
    #allocation5 [shape = 'u8[8192]{0}', space=vmem, size = 0x2000, scoped, tag = 'input window, operand 1, single buffered']
    #allocation6 [shape = 's32[1]{0}', space=sflag, size = 0x4, scoped, tag = 'scoped memory for tpu_custom_call.1']
    #allocation7 [shape = 'u8[65536]{0}', space=vmem, size = 0x10000, scoped, tag = 'input window, operand 3, single buffered']
    #allocation8 [shape = 'u8[65536]{0}', space=vmem, size = 0x10000, scoped, tag = 'input window, operand 5, single buffered']
    #allocation9 [shape = 's32[1]{0}', space=sflag, size = 0x4, scoped, tag = 'scoped memory for tpu_custom_call.1']
    #allocation10 [shape = 'u8[4096]{0}', space=vmem, size = 0x1000, scoped, tag = 'output window, operand 0, single buffered']
    %14 = vsyncpa [#allocation3], 0
    %15 = vsyncpa [#allocation6], 0
    %16 = vsyncpa [#allocation9], 0
    %17 = vsyncpa [#allocation4], 0
    // Predicated region
    $region2: #{tpu_custom_call.1} parent=1 // pred_check
      _
    $region3: #{tpu_custom_call.1} parent=1 // pred_check_branch
      %19 = sbr.rel (0) target = $region5
    $region4: #{tpu_custom_call.1} parent=1 // pred_region
      %s21 = ssub.s32 128, 128
      %22 = vsyncadd [#allocation3], %s21
      %s24 = sshll.u32 [#allocation2], 4
      %s25 = int_to_ptr.vmem [resolvable:$true] %s24
      %27 = dma.hbm_to_vmem [thread:$0]  %s0, 128, %s25, [#allocation3]
    $region5: #{tpu_custom_call.1} parent=1 // pred_fallthru
      _
    // Predicated region
    $region6: #{tpu_custom_call.1} parent=1 // pred_check
      _
    $region7: #{tpu_custom_call.1} parent=1 // pred_check_branch
      %29 = sbr.rel (0) target = $region9
    $region8: #{tpu_custom_call.1} parent=1 // pred_region
      %s31 = ssub.s32 256, 256
      %32 = vsyncadd [#allocation6], %s31
      %s33 = sshll.u32 [#allocation5], 4
      %s34 = int_to_ptr.vmem [resolvable:$true] %s33
      %39 = dma.hbm_to_vmem [thread:$0]  %s1, 256, %s34, [#allocation6], 128, 128, 8
    $region9: #{tpu_custom_call.1} parent=1 // pred_fallthru
      _
    // Predicated region
    $region10: #{tpu_custom_call.1} parent=1 // pred_check
      _
    $region11: #{tpu_custom_call.1} parent=1 // pred_check_branch
      %41 = sbr.rel (0) target = $region13
    $region12: #{tpu_custom_call.1} parent=1 // pred_region
      _
    $region13: #{tpu_custom_call.1} parent=1 // pred_fallthru
      _
    // Predicated region
    $region14: #{tpu_custom_call.1} parent=1 // pred_check
      _
    $region15: #{tpu_custom_call.1} parent=1 // pred_check_branch
      %43 = sbr.rel (0) target = $region17
    $region16: #{tpu_custom_call.1} parent=1 // pred_region
      %s45 = ssub.s32 2048, 2048
      %46 = vsyncadd [#allocation6], %s45
      %s47 = sshll.u32 [#allocation7], 4
      %s48 = int_to_ptr.vmem [resolvable:$true] %s47
      %53 = dma.hbm_to_vmem [thread:$0]  %s3, 2048, %s48, [#allocation6], 128, 128, 8
    $region17: #{tpu_custom_call.1} parent=1 // pred_fallthru
      _
    // Predicated region
    $region18: #{tpu_custom_call.1} parent=1 // pred_check
      _
    $region19: #{tpu_custom_call.1} parent=1 // pred_check_branch
      %55 = sbr.rel (0) target = $region21
    $region20: #{tpu_custom_call.1} parent=1 // pred_region
      _
    $region21: #{tpu_custom_call.1} parent=1 // pred_fallthru
      _
    // Predicated region
    $region22: #{tpu_custom_call.1} parent=1 // pred_check
      _
    $region23: #{tpu_custom_call.1} parent=1 // pred_check_branch
      %57 = sbr.rel (0) target = $region25
    $region24: #{tpu_custom_call.1} parent=1 // pred_region
      %s59 = ssub.s32 2048, 2048
      %60 = vsyncadd [#allocation9], %s59
      %s61 = sshll.u32 [#allocation8], 4
      %s62 = int_to_ptr.vmem [resolvable:$true] %s61
      %67 = dma.hbm_to_vmem [thread:$0]  %s5, 2048, %s62, [#allocation9], 128, 128, 8
    $region25: #{tpu_custom_call.1} parent=1 // pred_fallthru
      _
    // Predicated region
    $region26: #{tpu_custom_call.1} parent=1 // pred_check
      _
    $region27: #{tpu_custom_call.1} parent=1 // pred_check_branch
      %69 = sbr.rel (0) target = $region29
    $region28: #{tpu_custom_call.1} parent=1 // pred_region
      _
    $region29: #{tpu_custom_call.1} parent=1 // pred_fallthru
      _
    // Predicated region
    $region30: #{tpu_custom_call.1} parent=1 // pred_check
      _
    $region31: #{tpu_custom_call.1} parent=1 // pred_check_branch
      %71 = sbr.rel (0) target = $region33
    $region32: #{tpu_custom_call.1} parent=1 // pred_region
      _
    $region33: #{tpu_custom_call.1} parent=1 // pred_fallthru
      _
    // Predicated region
    $region34: #{tpu_custom_call.1} parent=1 // pred_check
      _
    $region35: #{tpu_custom_call.1} parent=1 // pred_check_branch
      %73 = sbr.rel (0) target = $region37
    $region36: #{tpu_custom_call.1} parent=1 // pred_region
      _
    $region37: #{tpu_custom_call.1} parent=1 // pred_fallthru
      _
    // Predicated region
    $region38: #{tpu_custom_call.1} parent=1 // pred_check
      _
    $region39: #{tpu_custom_call.1} parent=1 // pred_check_branch
      %75 = sbr.rel (0) target = $region41
    $region40: #{tpu_custom_call.1} parent=1 // pred_region
      %76 = dma.done [#allocation3], 128
    $region41: #{tpu_custom_call.1} parent=1 // pred_fallthru
      _
    // Predicated region
    $region42: #{tpu_custom_call.1} parent=1 // pred_check
      _
    $region43: #{tpu_custom_call.1} parent=1 // pred_check_branch
      %78 = sbr.rel (0) target = $region45
    $region44: #{tpu_custom_call.1} parent=1 // pred_region
      %79 = dma.done [#allocation6], 256
    $region45: #{tpu_custom_call.1} parent=1 // pred_fallthru
      _
    // Predicated region
    $region46: #{tpu_custom_call.1} parent=1 // pred_check
      _
    $region47: #{tpu_custom_call.1} parent=1 // pred_check_branch
      %81 = sbr.rel (0) target = $region49
    $region48: #{tpu_custom_call.1} parent=1 // pred_region
      %82 = dma.done [#allocation6], 2048
    $region49: #{tpu_custom_call.1} parent=1 // pred_fallthru
      _
    // Predicated region
    $region50: #{tpu_custom_call.1} parent=1 // pred_check
      _
    $region51: #{tpu_custom_call.1} parent=1 // pred_check_branch
      %84 = sbr.rel (0) target = $region53
    $region52: #{tpu_custom_call.1} parent=1 // pred_region
      %85 = dma.done [#allocation9], 2048
    $region53: #{tpu_custom_call.1} parent=1 // pred_fallthru
      _
    %v86 = vld [vmem:[%s7] sm:$0xff]
    %v87 = vld [vmem:[%s7 + $0x8] sm:$0xff]
    %v88 = vld [vmem:[%s8] sm:$0x1]
    %v89 = vld [vmem:[#allocation5] sm:$0xff]
    %v90 = vld [vmem:[#allocation5 + $0x8] sm:$0xff]
    %v91 = vld [vmem:[%s2] sm:$0x1]
    %v92 = vld [vmem:[#allocation7] sm:$0xff]
    %v93 = vld [vmem:[#allocation7 + $0x8] sm:$0xff]
    %v94 = vld [vmem:[#allocation7 + $0x10] sm:$0xff]
    %v95 = vld [vmem:[#allocation7 + $0x18] sm:$0xff]
    %v96 = vld [vmem:[#allocation7 + $0x20] sm:$0xff]
    %v97 = vld [vmem:[#allocation7 + $0x28] sm:$0xff]
    %v98 = vld [vmem:[#allocation7 + $0x30] sm:$0xff]
    %v99 = vld [vmem:[#allocation7 + $0x38] sm:$0xff]
    %v100 = vld [vmem:[#allocation7 + $0x40] sm:$0xff]
    %v101 = vld [vmem:[#allocation7 + $0x48] sm:$0xff]
    %v102 = vld [vmem:[#allocation7 + $0x50] sm:$0xff]
    %v103 = vld [vmem:[#allocation7 + $0x58] sm:$0xff]
    %v104 = vld [vmem:[#allocation7 + $0x60] sm:$0xff]
    %v105 = vld [vmem:[#allocation7 + $0x68] sm:$0xff]
    %v106 = vld [vmem:[#allocation7 + $0x70] sm:$0xff]
    %v107 = vld [vmem:[#allocation7 + $0x78] sm:$0xff]
    %v108 = vld [vmem:[%s4] sm:$0x1]
    %v109 = vld [vmem:[#allocation8] sm:$0xff]
    %v110 = vld [vmem:[#allocation8 + $0x8] sm:$0xff]
    %v111 = vld [vmem:[#allocation8 + $0x10] sm:$0xff]
    %v112 = vld [vmem:[#allocation8 + $0x18] sm:$0xff]
    %v113 = vld [vmem:[#allocation8 + $0x20] sm:$0xff]
    %v114 = vld [vmem:[#allocation8 + $0x28] sm:$0xff]
    %v115 = vld [vmem:[#allocation8 + $0x30] sm:$0xff]
    %v116 = vld [vmem:[#allocation8 + $0x38] sm:$0xff]
    %v117 = vld [vmem:[#allocation8 + $0x40] sm:$0xff]
    %v118 = vld [vmem:[#allocation8 + $0x48] sm:$0xff]
    %v119 = vld [vmem:[#allocation8 + $0x50] sm:$0xff]
    %v120 = vld [vmem:[#allocation8 + $0x58] sm:$0xff]
    %v121 = vld [vmem:[#allocation8 + $0x60] sm:$0xff]
    %v122 = vld [vmem:[#allocation8 + $0x68] sm:$0xff]
    %v123 = vld [vmem:[#allocation8 + $0x70] sm:$0xff]
    %v124 = vld [vmem:[#allocation8 + $0x78] sm:$0xff]
    %v125 = vld [vmem:[%s6] sm:$0x1]
    %v126 = vld [vmem:[#allocation2] sm:$0xff]
    %v128 = vlaneseq
    %v129 = vshrl.u32 %v128, 7
    %v130 = vsub.s32 0, %v129
    %v131 = vrot.slane %v91, %v130
    %vm133 = vcmask 130048
    %v135 = vsel %vm133, %v126, 0
    %137 = vmatprep.subr.mxu0 0.0
    %v138 = vand.u32 %v89, 4294901760
    %139 = vmatpush1.msra.mxu0 %v138
    %140 = vmatprep.subr.mxu0 0.0
    %v141 = vand.u32 %v90, 4294901760
    %142 = vmatpush1.msra.mxu0 %v141
    %143 = vmatprep.subr.mxu0 0.0
    %144 = vmatpush1.msra.mxu0 0.0
    %145 = vmatprep.subr.mxu0 0.0
    %146 = vmatpush1.msra.mxu0 0.0
    %147 = vmatprep.subr.mxu0 0.0
    %148 = vmatpush1.msra.mxu0 0.0
    %149 = vmatprep.subr.mxu0 0.0
    %150 = vmatpush1.msra.mxu0 0.0
    %151 = vmatprep.subr.mxu0 0.0
    %152 = vmatpush1.msra.mxu0 0.0
    %153 = vmatprep.subr.mxu0 0.0
    %154 = vmatpush1.msra.mxu0 0.0
    %155 = vmatprep.subr.mxu0 0.0
    %156 = vmatpush1.msra.mxu0 0.0
    %157 = vmatprep.subr.mxu0 0.0
    %158 = vmatpush1.msra.mxu0 0.0
    %159 = vmatprep.subr.mxu0 0.0
    %160 = vmatpush1.msra.mxu0 0.0
    %161 = vmatprep.subr.mxu0 0.0
    %162 = vmatpush1.msra.mxu0 0.0
    %163 = vmatprep.subr.mxu0 0.0
    %164 = vmatpush1.msra.mxu0 0.0
    %165 = vmatprep.subr.mxu0 0.0
    %166 = vmatpush1.msra.mxu0 0.0
    %167 = vmatprep.subr.mxu0 0.0
    %168 = vmatpush1.msra.mxu0 0.0
    %169 = vmatprep.subr.mxu0 0.0
    %170 = vmatpush1.msra.mxu0 0.0
    %171 = vmatprep.subr.mxu0 0.0
    %172 = vmatpush1.msra.mxu0 0.0
    %173 = vmatprep.subr.mxu0 0.0
    %174 = vmatpush1.msra.mxu0 0.0
    %175 = vmatprep.subr.mxu0 0.0
    %176 = vmatpush1.msra.mxu0 0.0
    %177 = vmatprep.subr.mxu0 0.0
    %178 = vmatpush1.msra.mxu0 0.0
    %179 = vmatprep.subr.mxu0 0.0
    %180 = vmatpush1.msra.mxu0 0.0
    %181 = vmatprep.subr.mxu0 0.0
    %182 = vmatpush1.msra.mxu0 0.0
    %183 = vmatprep.subr.mxu0 0.0
    %184 = vmatpush1.msra.mxu0 0.0
    %185 = vmatprep.subr.mxu0 0.0
    %186 = vmatpush1.msra.mxu0 0.0
    %187 = vmatprep.subr.mxu0 0.0
    %188 = vmatpush1.msra.mxu0 0.0
    %189 = vmatprep.subr.mxu0 0.0
    %190 = vmatpush1.msra.mxu0 0.0
    %191 = vmatprep.subr.mxu0 0.0
    %192 = vmatpush1.msra.mxu0 0.0
    %193 = vmatprep.subr.mxu0 0.0
    %194 = vmatpush1.msra.mxu0 0.0
    %195 = vmatprep.subr.mxu0 0.0
    %196 = vmatpush1.msra.mxu0 0.0
    %197 = vmatprep.subr.mxu0 0.0
    %198 = vmatpush1.msra.mxu0 0.0
    %199 = vmatprep.subr.mxu0 0.0
    %200 = vmatpush1.msra.mxu0 0.0
    %201 = vmatprep.subr.mxu0 0.0
    %202 = vmatpush1.msra.mxu0 0.0
    %203 = vmatprep.mubr.f32.mxu0 0.0
    %v204 = vand.u32 %v135, 4294901760
    %v205 = vsub.f32 %v135, %v204
    %v206 = vand.u32 %v205, 4294901760
    %v207 = vsub.f32 %v205, %v206
    %v208 = vand.u32 %v207, 4294901760
    %209 = vmatmul.mubr.f32.gmra.mrb[0].mxu0 %v208
    %v210 = vpop.f32.mrb[0].mxu0
    %v211 = vadd.f32 %v131, %v210
    %v212 = vpop.f32.mrb[0].mxu0
    %213 = vdwg.mxu0
    %214 = vmatprep.subr.mxu0 0.0
    %v215 = vand.u32 %v89, 4294901760
    %v216 = vsub.f32 %v89, %v215
    %v217 = vand.u32 %v216, 4294901760
    %v218 = vsub.f32 %v216, %v217
    %v219 = vand.u32 %v218, 4294901760
    %220 = vmatpush1.msra.mxu0 %v219
    %221 = vmatprep.subr.mxu0 0.0
    %v222 = vand.u32 %v90, 4294901760
    %v223 = vsub.f32 %v90, %v222
    %v224 = vand.u32 %v223, 4294901760
    %v225 = vsub.f32 %v223, %v224
    %v226 = vand.u32 %v225, 4294901760
    %227 = vmatpush1.msra.mxu0 %v226
    %228 = vmatprep.subr.mxu0 0.0
    %229 = vmatpush1.msra.mxu0 0.0
    %230 = vmatprep.subr.mxu0 0.0
    %231 = vmatpush1.msra.mxu0 0.0
    %232 = vmatprep.subr.mxu0 0.0
    %233 = vmatpush1.msra.mxu0 0.0
    %234 = vmatprep.subr.mxu0 0.0
    %235 = vmatpush1.msra.mxu0 0.0
    %236 = vmatprep.subr.mxu0 0.0
    %237 = vmatpush1.msra.mxu0 0.0
    %238 = vmatprep.subr.mxu0 0.0
    %239 = vmatpush1.msra.mxu0 0.0
    %240 = vmatprep.subr.mxu0 0.0
    %241 = vmatpush1.msra.mxu0 0.0
    %242 = vmatprep.subr.mxu0 0.0
    %243 = vmatpush1.msra.mxu0 0.0
    %244 = vmatprep.subr.mxu0 0.0
    %245 = vmatpush1.msra.mxu0 0.0
    %246 = vmatprep.subr.mxu0 0.0
    %247 = vmatpush1.msra.mxu0 0.0
    %248 = vmatprep.subr.mxu0 0.0
    %249 = vmatpush1.msra.mxu0 0.0
    %250 = vmatprep.subr.mxu0 0.0
    %251 = vmatpush1.msra.mxu0 0.0
    %252 = vmatprep.subr.mxu0 0.0
    %253 = vmatpush1.msra.mxu0 0.0
    %254 = vmatprep.subr.mxu0 0.0
    %255 = vmatpush1.msra.mxu0 0.0
    %256 = vmatprep.subr.mxu0 0.0
    %257 = vmatpush1.msra.mxu0 0.0
    %258 = vmatprep.subr.mxu0 0.0
    %259 = vmatpush1.msra.mxu0 0.0
    %260 = vmatprep.subr.mxu0 0.0
    %261 = vmatpush1.msra.mxu0 0.0
    %262 = vmatprep.subr.mxu0 0.0
    %263 = vmatpush1.msra.mxu0 0.0
    %264 = vmatprep.subr.mxu0 0.0
    %265 = vmatpush1.msra.mxu0 0.0
    %266 = vmatprep.subr.mxu0 0.0
    %267 = vmatpush1.msra.mxu0 0.0
    %268 = vmatprep.subr.mxu0 0.0
    %269 = vmatpush1.msra.mxu0 0.0
    %270 = vmatprep.subr.mxu0 0.0
    %271 = vmatpush1.msra.mxu0 0.0
    %272 = vmatprep.subr.mxu0 0.0
    %273 = vmatpush1.msra.mxu0 0.0
    %274 = vmatprep.subr.mxu0 0.0
    %275 = vmatpush1.msra.mxu0 0.0
    %276 = vmatprep.subr.mxu0 0.0
    %277 = vmatpush1.msra.mxu0 0.0
    %278 = vmatprep.subr.mxu0 0.0
    %279 = vmatpush1.msra.mxu0 0.0
    %280 = vmatprep.subr.mxu0 0.0
    %281 = vmatpush1.msra.mxu0 0.0
    %282 = vmatprep.subr.mxu0 0.0
    %283 = vmatpush1.msra.mxu0 0.0
    %284 = vmatprep.subr.mxu0 0.0
    %285 = vmatpush1.msra.mxu0 0.0
    %286 = vmatprep.subr.mxu0 0.0
    %287 = vmatpush1.msra.mxu0 0.0
    %288 = vmatprep.mubr.f32.mxu0 0.0
    %v289 = vand.u32 %v135, 4294901760
    %290 = vmatmul.mubr.f32.gmra.mrb[0].mxu0 %v289
    %v291 = vpop.f32.mrb[0].mxu0
    %v292 = vadd.f32 %v211, %v291
    %v293 = vpop.f32.mrb[0].mxu0
    %294 = vdwg.mxu0
    %295 = vmatprep.subr.mxu0 0.0
    %v296 = vand.u32 %v89, 4294901760
    %v297 = vsub.f32 %v89, %v296
    %298 = vmatpush1.msra.mxu0 %v297
    %299 = vmatprep.subr.mxu0 0.0
    %v300 = vand.u32 %v90, 4294901760
    %v301 = vsub.f32 %v90, %v300
    %302 = vmatpush1.msra.mxu0 %v301
    %303 = vmatprep.subr.mxu0 0.0
    %304 = vmatpush1.msra.mxu0 0.0
    %305 = vmatprep.subr.mxu0 0.0
    %306 = vmatpush1.msra.mxu0 0.0
    %307 = vmatprep.subr.mxu0 0.0
    %308 = vmatpush1.msra.mxu0 0.0
    %309 = vmatprep.subr.mxu0 0.0
    %310 = vmatpush1.msra.mxu0 0.0
    %311 = vmatprep.subr.mxu0 0.0
    %312 = vmatpush1.msra.mxu0 0.0
    %313 = vmatprep.subr.mxu0 0.0
    %314 = vmatpush1.msra.mxu0 0.0
    %315 = vmatprep.subr.mxu0 0.0
    %316 = vmatpush1.msra.mxu0 0.0
    %317 = vmatprep.subr.mxu0 0.0
    %318 = vmatpush1.msra.mxu0 0.0
    %319 = vmatprep.subr.mxu0 0.0
    %320 = vmatpush1.msra.mxu0 0.0
    %321 = vmatprep.subr.mxu0 0.0
    %322 = vmatpush1.msra.mxu0 0.0
    %323 = vmatprep.subr.mxu0 0.0
    %324 = vmatpush1.msra.mxu0 0.0
    %325 = vmatprep.subr.mxu0 0.0
    %326 = vmatpush1.msra.mxu0 0.0
    %327 = vmatprep.subr.mxu0 0.0
    %328 = vmatpush1.msra.mxu0 0.0
    %329 = vmatprep.subr.mxu0 0.0
    %330 = vmatpush1.msra.mxu0 0.0
    %331 = vmatprep.subr.mxu0 0.0
    %332 = vmatpush1.msra.mxu0 0.0
    %333 = vmatprep.subr.mxu0 0.0
    %334 = vmatpush1.msra.mxu0 0.0
    %335 = vmatprep.subr.mxu0 0.0
    %336 = vmatpush1.msra.mxu0 0.0
    %337 = vmatprep.subr.mxu0 0.0
    %338 = vmatpush1.msra.mxu0 0.0
    %339 = vmatprep.subr.mxu0 0.0
    %340 = vmatpush1.msra.mxu0 0.0
    %341 = vmatprep.subr.mxu0 0.0
    %342 = vmatpush1.msra.mxu0 0.0
    %343 = vmatprep.subr.mxu0 0.0
    %344 = vmatpush1.msra.mxu0 0.0
    %345 = vmatprep.subr.mxu0 0.0
    %346 = vmatpush1.msra.mxu0 0.0
    %347 = vmatprep.subr.mxu0 0.0
    %348 = vmatpush1.msra.mxu0 0.0
    %349 = vmatprep.subr.mxu0 0.0
    %350 = vmatpush1.msra.mxu0 0.0
    %351 = vmatprep.subr.mxu0 0.0
    %352 = vmatpush1.msra.mxu0 0.0
    %353 = vmatprep.subr.mxu0 0.0
    %354 = vmatpush1.msra.mxu0 0.0
    %355 = vmatprep.subr.mxu0 0.0
    %356 = vmatpush1.msra.mxu0 0.0
    %357 = vmatprep.subr.mxu0 0.0
    %358 = vmatpush1.msra.mxu0 0.0
    %359 = vmatprep.subr.mxu0 0.0
    %360 = vmatpush1.msra.mxu0 0.0
    %361 = vmatprep.subr.mxu0 0.0
    %362 = vmatpush1.msra.mxu0 0.0
    %363 = vmatprep.mubr.f32.mxu0 0.0
    %v364 = vand.u32 %v135, 4294901760
    %v365 = vsub.f32 %v135, %v364
    %366 = vmatmul.mubr.f32.gmra.mrb[0].mxu0 %v365
    %v367 = vpop.f32.mrb[0].mxu0
    %v368 = vadd.f32 %v292, %v367
    %v369 = vpop.f32.mrb[0].mxu0
    %370 = vdwg.mxu0
    %371 = vmatprep.subr.mxu0 0.0
    %v372 = vand.u32 %v89, 4294901760
    %373 = vmatpush1.msra.mxu0 %v372
    %374 = vmatprep.subr.mxu0 0.0
    %v375 = vand.u32 %v90, 4294901760
    %376 = vmatpush1.msra.mxu0 %v375
    %377 = vmatprep.subr.mxu0 0.0
    %378 = vmatpush1.msra.mxu0 0.0
    %379 = vmatprep.subr.mxu0 0.0
    %380 = vmatpush1.msra.mxu0 0.0
    %381 = vmatprep.subr.mxu0 0.0
    %382 = vmatpush1.msra.mxu0 0.0
    %383 = vmatprep.subr.mxu0 0.0
    %384 = vmatpush1.msra.mxu0 0.0
    %385 = vmatprep.subr.mxu0 0.0
    %386 = vmatpush1.msra.mxu0 0.0
    %387 = vmatprep.subr.mxu0 0.0
    %388 = vmatpush1.msra.mxu0 0.0
    %389 = vmatprep.subr.mxu0 0.0
    %390 = vmatpush1.msra.mxu0 0.0
    %391 = vmatprep.subr.mxu0 0.0
    %392 = vmatpush1.msra.mxu0 0.0
    %393 = vmatprep.subr.mxu0 0.0
    %394 = vmatpush1.msra.mxu0 0.0
    %395 = vmatprep.subr.mxu0 0.0
    %396 = vmatpush1.msra.mxu0 0.0
    %397 = vmatprep.subr.mxu0 0.0
    %398 = vmatpush1.msra.mxu0 0.0
    %399 = vmatprep.subr.mxu0 0.0
    %400 = vmatpush1.msra.mxu0 0.0
    %401 = vmatprep.subr.mxu0 0.0
    %402 = vmatpush1.msra.mxu0 0.0
    %403 = vmatprep.subr.mxu0 0.0
    %404 = vmatpush1.msra.mxu0 0.0
    %405 = vmatprep.subr.mxu0 0.0
    %406 = vmatpush1.msra.mxu0 0.0
    %407 = vmatprep.subr.mxu0 0.0
    %408 = vmatpush1.msra.mxu0 0.0
    %409 = vmatprep.subr.mxu0 0.0
    %410 = vmatpush1.msra.mxu0 0.0
    %411 = vmatprep.subr.mxu0 0.0
    %412 = vmatpush1.msra.mxu0 0.0
    %413 = vmatprep.subr.mxu0 0.0
    %414 = vmatpush1.msra.mxu0 0.0
    %415 = vmatprep.subr.mxu0 0.0
    %416 = vmatpush1.msra.mxu0 0.0
    %417 = vmatprep.subr.mxu0 0.0
    %418 = vmatpush1.msra.mxu0 0.0
    %419 = vmatprep.subr.mxu0 0.0
    %420 = vmatpush1.msra.mxu0 0.0
    %421 = vmatprep.subr.mxu0 0.0
    %422 = vmatpush1.msra.mxu0 0.0
    %423 = vmatprep.subr.mxu0 0.0
    %424 = vmatpush1.msra.mxu0 0.0
    %425 = vmatprep.subr.mxu0 0.0
    %426 = vmatpush1.msra.mxu0 0.0
    %427 = vmatprep.subr.mxu0 0.0
    %428 = vmatpush1.msra.mxu0 0.0
    %429 = vmatprep.subr.mxu0 0.0
    %430 = vmatpush1.msra.mxu0 0.0
    %431 = vmatprep.subr.mxu0 0.0
    %432 = vmatpush1.msra.mxu0 0.0
    %433 = vmatprep.subr.mxu0 0.0
    %434 = vmatpush1.msra.mxu0 0.0
    %435 = vmatprep.subr.mxu0 0.0
    %436 = vmatpush1.msra.mxu0 0.0
    %437 = vmatprep.mubr.f32.mxu0 0.0
    %v438 = vand.u32 %v135, 4294901760
    %v439 = vsub.f32 %v135, %v438
    %v440 = vand.u32 %v439, 4294901760
    %441 = vmatmul.mubr.f32.gmra.mrb[0].mxu0 %v440
    %v442 = vpop.f32.mrb[0].mxu0
    %v443 = vadd.f32 %v368, %v442
    %v444 = vpop.f32.mrb[0].mxu0
    %445 = vdwg.mxu0
    %446 = vmatprep.subr.mxu0 0.0
    %v447 = vand.u32 %v89, 4294901760
    %v448 = vsub.f32 %v89, %v447
    %v449 = vand.u32 %v448, 4294901760
    %450 = vmatpush1.msra.mxu0 %v449
    %451 = vmatprep.subr.mxu0 0.0
    %v452 = vand.u32 %v90, 4294901760
    %v453 = vsub.f32 %v90, %v452
    %v454 = vand.u32 %v453, 4294901760
    %455 = vmatpush1.msra.mxu0 %v454
    %456 = vmatprep.subr.mxu0 0.0
    %457 = vmatpush1.msra.mxu0 0.0
    %458 = vmatprep.subr.mxu0 0.0
    %459 = vmatpush1.msra.mxu0 0.0
    %460 = vmatprep.subr.mxu0 0.0
    %461 = vmatpush1.msra.mxu0 0.0
    %462 = vmatprep.subr.mxu0 0.0
    %463 = vmatpush1.msra.mxu0 0.0
    %464 = vmatprep.subr.mxu0 0.0
    %465 = vmatpush1.msra.mxu0 0.0
    %466 = vmatprep.subr.mxu0 0.0
    %467 = vmatpush1.msra.mxu0 0.0
    %468 = vmatprep.subr.mxu0 0.0
    %469 = vmatpush1.msra.mxu0 0.0
    %470 = vmatprep.subr.mxu0 0.0
    %471 = vmatpush1.msra.mxu0 0.0
    %472 = vmatprep.subr.mxu0 0.0
    %473 = vmatpush1.msra.mxu0 0.0
    %474 = vmatprep.subr.mxu0 0.0
    %475 = vmatpush1.msra.mxu0 0.0
    %476 = vmatprep.subr.mxu0 0.0
    %477 = vmatpush1.msra.mxu0 0.0
    %478 = vmatprep.subr.mxu0 0.0
    %479 = vmatpush1.msra.mxu0 0.0
    %480 = vmatprep.subr.mxu0 0.0
    %481 = vmatpush1.msra.mxu0 0.0
    %482 = vmatprep.subr.mxu0 0.0
    %483 = vmatpush1.msra.mxu0 0.0
    %484 = vmatprep.subr.mxu0 0.0
    %485 = vmatpush1.msra.mxu0 0.0
    %486 = vmatprep.subr.mxu0 0.0
    %487 = vmatpush1.msra.mxu0 0.0
    %488 = vmatprep.subr.mxu0 0.0
    %489 = vmatpush1.msra.mxu0 0.0
    %490 = vmatprep.subr.mxu0 0.0
    %491 = vmatpush1.msra.mxu0 0.0
    %492 = vmatprep.subr.mxu0 0.0
    %493 = vmatpush1.msra.mxu0 0.0
    %494 = vmatprep.subr.mxu0 0.0
    %495 = vmatpush1.msra.mxu0 0.0
    %496 = vmatprep.subr.mxu0 0.0
    %497 = vmatpush1.msra.mxu0 0.0
    %498 = vmatprep.subr.mxu0 0.0
    %499 = vmatpush1.msra.mxu0 0.0
    %500 = vmatprep.subr.mxu0 0.0
    %501 = vmatpush1.msra.mxu0 0.0
    %502 = vmatprep.subr.mxu0 0.0
    %503 = vmatpush1.msra.mxu0 0.0
    %504 = vmatprep.subr.mxu0 0.0
    %505 = vmatpush1.msra.mxu0 0.0
    %506 = vmatprep.subr.mxu0 0.0
    %507 = vmatpush1.msra.mxu0 0.0
    %508 = vmatprep.subr.mxu0 0.0
    %509 = vmatpush1.msra.mxu0 0.0
    %510 = vmatprep.subr.mxu0 0.0
    %511 = vmatpush1.msra.mxu0 0.0
    %512 = vmatprep.subr.mxu0 0.0
    %513 = vmatpush1.msra.mxu0 0.0
    %514 = vmatprep.subr.mxu0 0.0
    %515 = vmatpush1.msra.mxu0 0.0
    %516 = vmatprep.mubr.f32.mxu0 0.0
    %v517 = vand.u32 %v135, 4294901760
    %518 = vmatmul.mubr.f32.gmra.mrb[0].mxu0 %v517
    %v519 = vpop.f32.mrb[0].mxu0
    %v520 = vadd.f32 %v443, %v519
    %v521 = vpop.f32.mrb[0].mxu0
    %522 = vdwg.mxu0
    %523 = vmatprep.subr.mxu0 0.0
    %v524 = vand.u32 %v89, 4294901760
    %525 = vmatpush1.msra.mxu0 %v524
    %526 = vmatprep.subr.mxu0 0.0
    %v527 = vand.u32 %v90, 4294901760
    %528 = vmatpush1.msra.mxu0 %v527
    %529 = vmatprep.subr.mxu0 0.0
    %530 = vmatpush1.msra.mxu0 0.0
    %531 = vmatprep.subr.mxu0 0.0
    %532 = vmatpush1.msra.mxu0 0.0
    %533 = vmatprep.subr.mxu0 0.0
    %534 = vmatpush1.msra.mxu0 0.0
    %535 = vmatprep.subr.mxu0 0.0
    %536 = vmatpush1.msra.mxu0 0.0
    %537 = vmatprep.subr.mxu0 0.0
    %538 = vmatpush1.msra.mxu0 0.0
    %539 = vmatprep.subr.mxu0 0.0
    %540 = vmatpush1.msra.mxu0 0.0
    %541 = vmatprep.subr.mxu0 0.0
    %542 = vmatpush1.msra.mxu0 0.0
    %543 = vmatprep.subr.mxu0 0.0
    %544 = vmatpush1.msra.mxu0 0.0
    %545 = vmatprep.subr.mxu0 0.0
    %546 = vmatpush1.msra.mxu0 0.0
    %547 = vmatprep.subr.mxu0 0.0
    %548 = vmatpush1.msra.mxu0 0.0
    %549 = vmatprep.subr.mxu0 0.0
    %550 = vmatpush1.msra.mxu0 0.0
    %551 = vmatprep.subr.mxu0 0.0
    %552 = vmatpush1.msra.mxu0 0.0
    %553 = vmatprep.subr.mxu0 0.0
    %554 = vmatpush1.msra.mxu0 0.0
    %555 = vmatprep.subr.mxu0 0.0
    %556 = vmatpush1.msra.mxu0 0.0
    %557 = vmatprep.subr.mxu0 0.0
    %558 = vmatpush1.msra.mxu0 0.0
    %559 = vmatprep.subr.mxu0 0.0
    %560 = vmatpush1.msra.mxu0 0.0
    %561 = vmatprep.subr.mxu0 0.0
    %562 = vmatpush1.msra.mxu0 0.0
    %563 = vmatprep.subr.mxu0 0.0
    %564 = vmatpush1.msra.mxu0 0.0
    %565 = vmatprep.subr.mxu0 0.0
    %566 = vmatpush1.msra.mxu0 0.0
    %567 = vmatprep.subr.mxu0 0.0
    %568 = vmatpush1.msra.mxu0 0.0
    %569 = vmatprep.subr.mxu0 0.0
    %570 = vmatpush1.msra.mxu0 0.0
    %571 = vmatprep.subr.mxu0 0.0
    %572 = vmatpush1.msra.mxu0 0.0
    %573 = vmatprep.subr.mxu0 0.0
    %574 = vmatpush1.msra.mxu0 0.0
    %575 = vmatprep.subr.mxu0 0.0
    %576 = vmatpush1.msra.mxu0 0.0
    %577 = vmatprep.subr.mxu0 0.0
    %578 = vmatpush1.msra.mxu0 0.0
    %579 = vmatprep.subr.mxu0 0.0
    %580 = vmatpush1.msra.mxu0 0.0
    %581 = vmatprep.subr.mxu0 0.0
    %582 = vmatpush1.msra.mxu0 0.0
    %583 = vmatprep.subr.mxu0 0.0
    %584 = vmatpush1.msra.mxu0 0.0
    %585 = vmatprep.subr.mxu0 0.0
    %586 = vmatpush1.msra.mxu0 0.0
    %587 = vmatprep.subr.mxu0 0.0
    %588 = vmatpush1.msra.mxu0 0.0
    %589 = vmatprep.mubr.f32.mxu0 0.0
    %v590 = vand.u32 %v135, 4294901760
    %591 = vmatmul.mubr.f32.gmra.mrb[0].mxu0 %v590
    %v592 = vpop.f32.mrb[0].mxu0
    %v593 = vadd.f32 %v520, %v592
    %v594 = vpop.f32.mrb[0].mxu0
    %595 = vdwg.mxu0
    %596 = vmatprep.subr.mxu0 0.0
    %v597 = vand.u32 %v86, 4294901760
    %598 = vmatpush1.msra.mxu0 %v597
    %599 = vmatprep.subr.mxu0 0.0
    %v600 = vand.u32 %v87, 4294901760
    %601 = vmatpush1.msra.mxu0 %v600
    %602 = vmatprep.subr.mxu0 0.0
    %603 = vmatpush1.msra.mxu0 0.0
    %604 = vmatprep.subr.mxu0 0.0
    %605 = vmatpush1.msra.mxu0 0.0
    %606 = vmatprep.subr.mxu0 0.0
    %607 = vmatpush1.msra.mxu0 0.0
    %608 = vmatprep.subr.mxu0 0.0
    %609 = vmatpush1.msra.mxu0 0.0
    %610 = vmatprep.subr.mxu0 0.0
    %611 = vmatpush1.msra.mxu0 0.0
    %612 = vmatprep.subr.mxu0 0.0
    %613 = vmatpush1.msra.mxu0 0.0
    %614 = vmatprep.subr.mxu0 0.0
    %615 = vmatpush1.msra.mxu0 0.0
    %616 = vmatprep.subr.mxu0 0.0
    %617 = vmatpush1.msra.mxu0 0.0
    %618 = vmatprep.subr.mxu0 0.0
    %619 = vmatpush1.msra.mxu0 0.0
    %620 = vmatprep.subr.mxu0 0.0
    %621 = vmatpush1.msra.mxu0 0.0
    %622 = vmatprep.subr.mxu0 0.0
    %623 = vmatpush1.msra.mxu0 0.0
    %624 = vmatprep.subr.mxu0 0.0
    %625 = vmatpush1.msra.mxu0 0.0
    %626 = vmatprep.subr.mxu0 0.0
    %627 = vmatpush1.msra.mxu0 0.0
    %628 = vmatprep.subr.mxu0 0.0
    %629 = vmatpush1.msra.mxu0 0.0
    %630 = vmatprep.subr.mxu0 0.0
    %631 = vmatpush1.msra.mxu0 0.0
    %632 = vmatprep.subr.mxu0 0.0
    %633 = vmatpush1.msra.mxu0 0.0
    %634 = vmatprep.subr.mxu0 0.0
    %635 = vmatpush1.msra.mxu0 0.0
    %636 = vmatprep.subr.mxu0 0.0
    %637 = vmatpush1.msra.mxu0 0.0
    %638 = vmatprep.subr.mxu0 0.0
    %639 = vmatpush1.msra.mxu0 0.0
    %640 = vmatprep.subr.mxu0 0.0
    %641 = vmatpush1.msra.mxu0 0.0
    %642 = vmatprep.subr.mxu0 0.0
    %643 = vmatpush1.msra.mxu0 0.0
    %644 = vmatprep.subr.mxu0 0.0
    %645 = vmatpush1.msra.mxu0 0.0
    %646 = vmatprep.subr.mxu0 0.0
    %647 = vmatpush1.msra.mxu0 0.0
    %648 = vmatprep.subr.mxu0 0.0
    %649 = vmatpush1.msra.mxu0 0.0
    %650 = vmatprep.subr.mxu0 0.0
    %651 = vmatpush1.msra.mxu0 0.0
    %652 = vmatprep.subr.mxu0 0.0
    %653 = vmatpush1.msra.mxu0 0.0
    %654 = vmatprep.subr.mxu0 0.0
    %655 = vmatpush1.msra.mxu0 0.0
    %656 = vmatprep.subr.mxu0 0.0
    %657 = vmatpush1.msra.mxu0 0.0
    %658 = vmatprep.subr.mxu0 0.0
    %659 = vmatpush1.msra.mxu0 0.0
    %660 = vmatprep.subr.mxu0 0.0
    %661 = vmatpush1.msra.mxu0 0.0
    %662 = vmatprep.mubr.f32.mxu0 0.0
    %v663 = vand.u32 %v135, 4294901760
    %v664 = vsub.f32 %v135, %v663
    %v665 = vand.u32 %v664, 4294901760
    %v666 = vsub.f32 %v664, %v665
    %v667 = vand.u32 %v666, 4294901760
    %668 = vmatmul.mubr.f32.gmra.mrb[0].mxu0 %v667
    %v669 = vpop.f32.mrb[0].mxu0
    %v670 = vadd.f32 0.0, %v669
    %v671 = vpop.f32.mrb[0].mxu0
    %672 = vdwg.mxu0
    %673 = vmatprep.subr.mxu0 0.0
    %v674 = vand.u32 %v86, 4294901760
    %v675 = vsub.f32 %v86, %v674
    %v676 = vand.u32 %v675, 4294901760
    %v677 = vsub.f32 %v675, %v676
    %v678 = vand.u32 %v677, 4294901760
    %679 = vmatpush1.msra.mxu0 %v678
    %680 = vmatprep.subr.mxu0 0.0
    %v681 = vand.u32 %v87, 4294901760
    %v682 = vsub.f32 %v87, %v681
    %v683 = vand.u32 %v682, 4294901760
    %v684 = vsub.f32 %v682, %v683
    %v685 = vand.u32 %v684, 4294901760
    %686 = vmatpush1.msra.mxu0 %v685
    %687 = vmatprep.subr.mxu0 0.0
    %688 = vmatpush1.msra.mxu0 0.0
    %689 = vmatprep.subr.mxu0 0.0
    %690 = vmatpush1.msra.mxu0 0.0
    %691 = vmatprep.subr.mxu0 0.0
    %692 = vmatpush1.msra.mxu0 0.0
    %693 = vmatprep.subr.mxu0 0.0
    %694 = vmatpush1.msra.mxu0 0.0
    %695 = vmatprep.subr.mxu0 0.0
    %696 = vmatpush1.msra.mxu0 0.0
    %697 = vmatprep.subr.mxu0 0.0
    %698 = vmatpush1.msra.mxu0 0.0
    %699 = vmatprep.subr.mxu0 0.0
    %700 = vmatpush1.msra.mxu0 0.0
    %701 = vmatprep.subr.mxu0 0.0
    %702 = vmatpush1.msra.mxu0 0.0
    %703 = vmatprep.subr.mxu0 0.0
    %704 = vmatpush1.msra.mxu0 0.0
    %705 = vmatprep.subr.mxu0 0.0
    %706 = vmatpush1.msra.mxu0 0.0
    %707 = vmatprep.subr.mxu0 0.0
    %708 = vmatpush1.msra.mxu0 0.0
    %709 = vmatprep.subr.mxu0 0.0
    %710 = vmatpush1.msra.mxu0 0.0
    %711 = vmatprep.subr.mxu0 0.0
    %712 = vmatpush1.msra.mxu0 0.0
    %713 = vmatprep.subr.mxu0 0.0
    %714 = vmatpush1.msra.mxu0 0.0
    %715 = vmatprep.subr.mxu0 0.0
    %716 = vmatpush1.msra.mxu0 0.0
    %717 = vmatprep.subr.mxu0 0.0
    %718 = vmatpush1.msra.mxu0 0.0
    %719 = vmatprep.subr.mxu0 0.0
    %720 = vmatpush1.msra.mxu0 0.0
    %721 = vmatprep.subr.mxu0 0.0
    %722 = vmatpush1.msra.mxu0 0.0
    %723 = vmatprep.subr.mxu0 0.0
    %724 = vmatpush1.msra.mxu0 0.0
    %725 = vmatprep.subr.mxu0 0.0
    %726 = vmatpush1.msra.mxu0 0.0
    %727 = vmatprep.subr.mxu0 0.0
    %728 = vmatpush1.msra.mxu0 0.0
    %729 = vmatprep.subr.mxu0 0.0
    %730 = vmatpush1.msra.mxu0 0.0
    %731 = vmatprep.subr.mxu0 0.0
    %732 = vmatpush1.msra.mxu0 0.0
    %733 = vmatprep.subr.mxu0 0.0
    %734 = vmatpush1.msra.mxu0 0.0
    %735 = vmatprep.subr.mxu0 0.0
    %736 = vmatpush1.msra.mxu0 0.0
    %737 = vmatprep.subr.mxu0 0.0
    %738 = vmatpush1.msra.mxu0 0.0
    %739 = vmatprep.subr.mxu0 0.0
    %740 = vmatpush1.msra.mxu0 0.0
    %741 = vmatprep.subr.mxu0 0.0
    %742 = vmatpush1.msra.mxu0 0.0
    %743 = vmatprep.subr.mxu0 0.0
    %744 = vmatpush1.msra.mxu0 0.0
    %745 = vmatprep.subr.mxu0 0.0
    %746 = vmatpush1.msra.mxu0 0.0
    %747 = vmatprep.mubr.f32.mxu0 0.0
    %v748 = vand.u32 %v135, 4294901760
    %749 = vmatmul.mubr.f32.gmra.mrb[0].mxu0 %v748
    %v750 = vpop.f32.mrb[0].mxu0
    %v751 = vadd.f32 %v670, %v750
    %v752 = vpop.f32.mrb[0].mxu0
    %753 = vdwg.mxu0
    %754 = vmatprep.subr.mxu0 0.0
    %v755 = vand.u32 %v86, 4294901760
    %v756 = vsub.f32 %v86, %v755
    %757 = vmatpush1.msra.mxu0 %v756
    %758 = vmatprep.subr.mxu0 0.0
    %v759 = vand.u32 %v87, 4294901760
    %v760 = vsub.f32 %v87, %v759
    %761 = vmatpush1.msra.mxu0 %v760
    %762 = vmatprep.subr.mxu0 0.0
    %763 = vmatpush1.msra.mxu0 0.0
    %764 = vmatprep.subr.mxu0 0.0
    %765 = vmatpush1.msra.mxu0 0.0
    %766 = vmatprep.subr.mxu0 0.0
    %767 = vmatpush1.msra.mxu0 0.0
    %768 = vmatprep.subr.mxu0 0.0
    %769 = vmatpush1.msra.mxu0 0.0
    %770 = vmatprep.subr.mxu0 0.0
    %771 = vmatpush1.msra.mxu0 0.0
    %772 = vmatprep.subr.mxu0 0.0
    %773 = vmatpush1.msra.mxu0 0.0
    %774 = vmatprep.subr.mxu0 0.0
    %775 = vmatpush1.msra.mxu0 0.0
    %776 = vmatprep.subr.mxu0 0.0
    %777 = vmatpush1.msra.mxu0 0.0
    %778 = vmatprep.subr.mxu0 0.0
    %779 = vmatpush1.msra.mxu0 0.0
    %780 = vmatprep.subr.mxu0 0.0
    %781 = vmatpush1.msra.mxu0 0.0
    %782 = vmatprep.subr.mxu0 0.0
    %783 = vmatpush1.msra.mxu0 0.0
    %784 = vmatprep.subr.mxu0 0.0
    %785 = vmatpush1.msra.mxu0 0.0
    %786 = vmatprep.subr.mxu0 0.0
    %787 = vmatpush1.msra.mxu0 0.0
    %788 = vmatprep.subr.mxu0 0.0
    %789 = vmatpush1.msra.mxu0 0.0
    %790 = vmatprep.subr.mxu0 0.0
    %791 = vmatpush1.msra.mxu0 0.0
    %792 = vmatprep.subr.mxu0 0.0
    %793 = vmatpush1.msra.mxu0 0.0
    %794 = vmatprep.subr.mxu0 0.0
    %795 = vmatpush1.msra.mxu0 0.0
    %796 = vmatprep.subr.mxu0 0.0
    %797 = vmatpush1.msra.mxu0 0.0
    %798 = vmatprep.subr.mxu0 0.0
    %799 = vmatpush1.msra.mxu0 0.0
    %800 = vmatprep.subr.mxu0 0.0
    %801 = vmatpush1.msra.mxu0 0.0
    %802 = vmatprep.subr.mxu0 0.0
    %803 = vmatpush1.msra.mxu0 0.0
    %804 = vmatprep.subr.mxu0 0.0
    %805 = vmatpush1.msra.mxu0 0.0
    %806 = vmatprep.subr.mxu0 0.0
    %807 = vmatpush1.msra.mxu0 0.0
    %808 = vmatprep.subr.mxu0 0.0
    %809 = vmatpush1.msra.mxu0 0.0
    %810 = vmatprep.subr.mxu0 0.0
    %811 = vmatpush1.msra.mxu0 0.0
    %812 = vmatprep.subr.mxu0 0.0
    %813 = vmatpush1.msra.mxu0 0.0
    %814 = vmatprep.subr.mxu0 0.0
    %815 = vmatpush1.msra.mxu0 0.0
    %816 = vmatprep.subr.mxu0 0.0
    %817 = vmatpush1.msra.mxu0 0.0
    %818 = vmatprep.subr.mxu0 0.0
    %819 = vmatpush1.msra.mxu0 0.0
    %820 = vmatprep.subr.mxu0 0.0
    %821 = vmatpush1.msra.mxu0 0.0
    %822 = vmatprep.mubr.f32.mxu0 0.0
    %v823 = vand.u32 %v135, 4294901760
    %v824 = vsub.f32 %v135, %v823
    %825 = vmatmul.mubr.f32.gmra.mrb[0].mxu0 %v824
    %v826 = vpop.f32.mrb[0].mxu0
    %v827 = vadd.f32 %v751, %v826
    %v828 = vpop.f32.mrb[0].mxu0
    %829 = vdwg.mxu0
    %830 = vmatprep.subr.mxu0 0.0
    %v831 = vand.u32 %v86, 4294901760
    %832 = vmatpush1.msra.mxu0 %v831
    %833 = vmatprep.subr.mxu0 0.0
    %v834 = vand.u32 %v87, 4294901760
    %835 = vmatpush1.msra.mxu0 %v834
    %836 = vmatprep.subr.mxu0 0.0
    %837 = vmatpush1.msra.mxu0 0.0
    %838 = vmatprep.subr.mxu0 0.0
    %839 = vmatpush1.msra.mxu0 0.0
    %840 = vmatprep.subr.mxu0 0.0
    %841 = vmatpush1.msra.mxu0 0.0
    %842 = vmatprep.subr.mxu0 0.0
    %843 = vmatpush1.msra.mxu0 0.0
    %844 = vmatprep.subr.mxu0 0.0
    %845 = vmatpush1.msra.mxu0 0.0
    %846 = vmatprep.subr.mxu0 0.0
    %847 = vmatpush1.msra.mxu0 0.0
    %848 = vmatprep.subr.mxu0 0.0
    %849 = vmatpush1.msra.mxu0 0.0
    %850 = vmatprep.subr.mxu0 0.0
    %851 = vmatpush1.msra.mxu0 0.0
    %852 = vmatprep.subr.mxu0 0.0
    %853 = vmatpush1.msra.mxu0 0.0
    %854 = vmatprep.subr.mxu0 0.0
    %855 = vmatpush1.msra.mxu0 0.0
    %856 = vmatprep.subr.mxu0 0.0
    %857 = vmatpush1.msra.mxu0 0.0
    %858 = vmatprep.subr.mxu0 0.0
    %859 = vmatpush1.msra.mxu0 0.0
    %860 = vmatprep.subr.mxu0 0.0
    %861 = vmatpush1.msra.mxu0 0.0
    %862 = vmatprep.subr.mxu0 0.0
    %863 = vmatpush1.msra.mxu0 0.0
    %864 = vmatprep.subr.mxu0 0.0
    %865 = vmatpush1.msra.mxu0 0.0
    %866 = vmatprep.subr.mxu0 0.0
    %867 = vmatpush1.msra.mxu0 0.0
    %868 = vmatprep.subr.mxu0 0.0
    %869 = vmatpush1.msra.mxu0 0.0
    %870 = vmatprep.subr.mxu0 0.0
    %871 = vmatpush1.msra.mxu0 0.0
    %872 = vmatprep.subr.mxu0 0.0
    %873 = vmatpush1.msra.mxu0 0.0
    %874 = vmatprep.subr.mxu0 0.0
    %875 = vmatpush1.msra.mxu0 0.0
    %876 = vmatprep.subr.mxu0 0.0
    %877 = vmatpush1.msra.mxu0 0.0
    %878 = vmatprep.subr.mxu0 0.0
    %879 = vmatpush1.msra.mxu0 0.0
    %880 = vmatprep.subr.mxu0 0.0
    %881 = vmatpush1.msra.mxu0 0.0
    %882 = vmatprep.subr.mxu0 0.0
    %883 = vmatpush1.msra.mxu0 0.0
    %884 = vmatprep.subr.mxu0 0.0
    %885 = vmatpush1.msra.mxu0 0.0
    %886 = vmatprep.subr.mxu0 0.0
    %887 = vmatpush1.msra.mxu0 0.0
    %888 = vmatprep.subr.mxu0 0.0
    %889 = vmatpush1.msra.mxu0 0.0
    %890 = vmatprep.subr.mxu0 0.0
    %891 = vmatpush1.msra.mxu0 0.0
    %892 = vmatprep.subr.mxu0 0.0
    %893 = vmatpush1.msra.mxu0 0.0
    %894 = vmatprep.subr.mxu0 0.0
    %895 = vmatpush1.msra.mxu0 0.0
    %896 = vmatprep.mubr.f32.mxu0 0.0
    %v897 = vand.u32 %v135, 4294901760
    %v898 = vsub.f32 %v135, %v897
    %v899 = vand.u32 %v898, 4294901760
    %900 = vmatmul.mubr.f32.gmra.mrb[0].mxu0 %v899
    %v901 = vpop.f32.mrb[0].mxu0
    %v902 = vadd.f32 %v827, %v901
    %v903 = vpop.f32.mrb[0].mxu0
    %904 = vdwg.mxu0
    %905 = vmatprep.subr.mxu0 0.0
    %v906 = vand.u32 %v86, 4294901760
    %v907 = vsub.f32 %v86, %v906
    %v908 = vand.u32 %v907, 4294901760
    %909 = vmatpush1.msra.mxu0 %v908
    %910 = vmatprep.subr.mxu0 0.0
    %v911 = vand.u32 %v87, 4294901760
    %v912 = vsub.f32 %v87, %v911
    %v913 = vand.u32 %v912, 4294901760
    %914 = vmatpush1.msra.mxu0 %v913
    %915 = vmatprep.subr.mxu0 0.0
    %916 = vmatpush1.msra.mxu0 0.0
    %917 = vmatprep.subr.mxu0 0.0
    %918 = vmatpush1.msra.mxu0 0.0
    %919 = vmatprep.subr.mxu0 0.0
    %920 = vmatpush1.msra.mxu0 0.0
    %921 = vmatprep.subr.mxu0 0.0
    %922 = vmatpush1.msra.mxu0 0.0
    %923 = vmatprep.subr.mxu0 0.0
    %924 = vmatpush1.msra.mxu0 0.0
    %925 = vmatprep.subr.mxu0 0.0
    %926 = vmatpush1.msra.mxu0 0.0
    %927 = vmatprep.subr.mxu0 0.0
    %928 = vmatpush1.msra.mxu0 0.0
    %929 = vmatprep.subr.mxu0 0.0
    %930 = vmatpush1.msra.mxu0 0.0
    %931 = vmatprep.subr.mxu0 0.0
    %932 = vmatpush1.msra.mxu0 0.0
    %933 = vmatprep.subr.mxu0 0.0
    %934 = vmatpush1.msra.mxu0 0.0
    %935 = vmatprep.subr.mxu0 0.0
    %936 = vmatpush1.msra.mxu0 0.0
    %937 = vmatprep.subr.mxu0 0.0
    %938 = vmatpush1.msra.mxu0 0.0
    %939 = vmatprep.subr.mxu0 0.0
    %940 = vmatpush1.msra.mxu0 0.0
    %941 = vmatprep.subr.mxu0 0.0
    %942 = vmatpush1.msra.mxu0 0.0
    %943 = vmatprep.subr.mxu0 0.0
    %944 = vmatpush1.msra.mxu0 0.0
    %945 = vmatprep.subr.mxu0 0.0
    %946 = vmatpush1.msra.mxu0 0.0
    %947 = vmatprep.subr.mxu0 0.0
    %948 = vmatpush1.msra.mxu0 0.0
    %949 = vmatprep.subr.mxu0 0.0
    %950 = vmatpush1.msra.mxu0 0.0
    %951 = vmatprep.subr.mxu0 0.0
    %952 = vmatpush1.msra.mxu0 0.0
    %953 = vmatprep.subr.mxu0 0.0
    %954 = vmatpush1.msra.mxu0 0.0
    %955 = vmatprep.subr.mxu0 0.0
    %956 = vmatpush1.msra.mxu0 0.0
    %957 = vmatprep.subr.mxu0 0.0
    %958 = vmatpush1.msra.mxu0 0.0
    %959 = vmatprep.subr.mxu0 0.0
    %960 = vmatpush1.msra.mxu0 0.0
    %961 = vmatprep.subr.mxu0 0.0
    %962 = vmatpush1.msra.mxu0 0.0
    %963 = vmatprep.subr.mxu0 0.0
    %964 = vmatpush1.msra.mxu0 0.0
    %965 = vmatprep.subr.mxu0 0.0
    %966 = vmatpush1.msra.mxu0 0.0
    %967 = vmatprep.subr.mxu0 0.0
    %968 = vmatpush1.msra.mxu0 0.0
    %969 = vmatprep.subr.mxu0 0.0
    %970 = vmatpush1.msra.mxu0 0.0
    %971 = vmatprep.subr.mxu0 0.0
    %972 = vmatpush1.msra.mxu0 0.0
    %973 = vmatprep.subr.mxu0 0.0
    %974 = vmatpush1.msra.mxu0 0.0
    %975 = vmatprep.mubr.f32.mxu0 0.0
    %v976 = vand.u32 %v135, 4294901760
    %977 = vmatmul.mubr.f32.gmra.mrb[0].mxu0 %v976
    %v978 = vpop.f32.mrb[0].mxu0
    %v979 = vadd.f32 %v902, %v978
    %v980 = vpop.f32.mrb[0].mxu0
    %981 = vdwg.mxu0
    %982 = vmatprep.subr.mxu0 0.0
    %v983 = vand.u32 %v86, 4294901760
    %984 = vmatpush1.msra.mxu0 %v983
    %985 = vmatprep.subr.mxu0 0.0
    %v986 = vand.u32 %v87, 4294901760
    %987 = vmatpush1.msra.mxu0 %v986
    %988 = vmatprep.subr.mxu0 0.0
    %989 = vmatpush1.msra.mxu0 0.0
    %990 = vmatprep.subr.mxu0 0.0
    %991 = vmatpush1.msra.mxu0 0.0
    %992 = vmatprep.subr.mxu0 0.0
    %993 = vmatpush1.msra.mxu0 0.0
    %994 = vmatprep.subr.mxu0 0.0
    %995 = vmatpush1.msra.mxu0 0.0
    %996 = vmatprep.subr.mxu0 0.0
    %997 = vmatpush1.msra.mxu0 0.0
    %998 = vmatprep.subr.mxu0 0.0
    %999 = vmatpush1.msra.mxu0 0.0
    %1000 = vmatprep.subr.mxu0 0.0
    %1001 = vmatpush1.msra.mxu0 0.0
    %1002 = vmatprep.subr.mxu0 0.0
    %1003 = vmatpush1.msra.mxu0 0.0
    %1004 = vmatprep.subr.mxu0 0.0
    %1005 = vmatpush1.msra.mxu0 0.0
    %1006 = vmatprep.subr.mxu0 0.0
    %1007 = vmatpush1.msra.mxu0 0.0
    %1008 = vmatprep.subr.mxu0 0.0
    %1009 = vmatpush1.msra.mxu0 0.0
    %1010 = vmatprep.subr.mxu0 0.0
    %1011 = vmatpush1.msra.mxu0 0.0
    %1012 = vmatprep.subr.mxu0 0.0
    %1013 = vmatpush1.msra.mxu0 0.0
    %1014 = vmatprep.subr.mxu0 0.0
    %1015 = vmatpush1.msra.mxu0 0.0
    %1016 = vmatprep.subr.mxu0 0.0
    %1017 = vmatpush1.msra.mxu0 0.0
    %1018 = vmatprep.subr.mxu0 0.0
    %1019 = vmatpush1.msra.mxu0 0.0
    %1020 = vmatprep.subr.mxu0 0.0
    %1021 = vmatpush1.msra.mxu0 0.0
    %1022 = vmatprep.subr.mxu0 0.0
    %1023 = vmatpush1.msra.mxu0 0.0
    %1024 = vmatprep.subr.mxu0 0.0
    %1025 = vmatpush1.msra.mxu0 0.0
    %1026 = vmatprep.subr.mxu0 0.0
    %1027 = vmatpush1.msra.mxu0 0.0
    %1028 = vmatprep.subr.mxu0 0.0
    %1029 = vmatpush1.msra.mxu0 0.0
    %1030 = vmatprep.subr.mxu0 0.0
    %1031 = vmatpush1.msra.mxu0 0.0
    %1032 = vmatprep.subr.mxu0 0.0
    %1033 = vmatpush1.msra.mxu0 0.0
    %1034 = vmatprep.subr.mxu0 0.0
    %1035 = vmatpush1.msra.mxu0 0.0
    %1036 = vmatprep.subr.mxu0 0.0
    %1037 = vmatpush1.msra.mxu0 0.0
    %1038 = vmatprep.subr.mxu0 0.0
    %1039 = vmatpush1.msra.mxu0 0.0
    %1040 = vmatprep.subr.mxu0 0.0
    %1041 = vmatpush1.msra.mxu0 0.0
    %1042 = vmatprep.subr.mxu0 0.0
    %1043 = vmatpush1.msra.mxu0 0.0
    %1044 = vmatprep.subr.mxu0 0.0
    %1045 = vmatpush1.msra.mxu0 0.0
    %1046 = vmatprep.subr.mxu0 0.0
    %1047 = vmatpush1.msra.mxu0 0.0
    %1048 = vmatprep.mubr.f32.mxu0 0.0
    %v1049 = vand.u32 %v135, 4294901760
    %1050 = vmatmul.mubr.f32.gmra.mrb[0].mxu0 %v1049
    %v1051 = vpop.f32.mrb[0].mxu0
    %v1052 = vadd.f32 %v979, %v1051
    %v1053 = vpop.f32.mrb[0].mxu0
    %1054 = vdwg.mxu0
    %v1056 = vlaneseq
    %v1057 = vshrl.u32 %v1056, 7
    %v1058 = vsub.s32 0, %v1057
    %v1059 = vrot.slane %v88, %v1058
    %v1061 = vmul.f32 %v1052, %v1059
    %v1062 = vsub.f32 %v593, %v1061
    %v1063 = vmul.f32 %v88, 0.0
    %v1065 = vlaneseq
    %v1066 = vshrl.u32 %v1065, 7
    %v1067 = vsub.s32 0, %v1066
    %v1068 = vrot.slane %v1063, %v1067
    %v1070 = vadd.f32 %v1062, %v1068
    %v1071 = vadd.f32 %v1062, %v1059
    %v1072 = vmul.f32 %v593, 0.5
    %v1073 = vmul.f32 %v1070, 0.5
    %v1074 = vmul.f32 %v1071, 0.5
    %v1075 = vtanh.pop %v1072
    %v1076 = vtanh.pop %v1073
    %v1077 = vtanh.pop %v1074
    %v1078 = vmul.f32 %v1075, 0.5
    %v1079 = vmul.f32 %v1076, 0.5
    %v1080 = vmul.f32 %v1077, 0.5
    %v1081 = vadd.f32 %v1078, 0.5
    %v1082 = vadd.f32 %v1079, 0.5
    %v1083 = vadd.f32 %v1080, 0.5
    %v1085 = vlaneseq
    %v1086 = vshrl.u32 %v1085, 7
    %v1087 = vsub.s32 0, %v1086
    %v1088 = vrot.slane %v108, %v1087
    %1090 = vmatprep.subr.mxu0 0.0
    %v1091 = vand.u32 %v92, 4294901760
    %1092 = vmatpush1.msra.mxu0 %v1091
    %1093 = vmatprep.subr.mxu0 0.0
    %v1094 = vand.u32 %v93, 4294901760
    %1095 = vmatpush1.msra.mxu0 %v1094
    %1096 = vmatprep.subr.mxu0 0.0
    %v1097 = vand.u32 %v94, 4294901760
    %1098 = vmatpush1.msra.mxu0 %v1097
    %1099 = vmatprep.subr.mxu0 0.0
    %v1100 = vand.u32 %v95, 4294901760
    %1101 = vmatpush1.msra.mxu0 %v1100
    %1102 = vmatprep.subr.mxu0 0.0
    %v1103 = vand.u32 %v96, 4294901760
    %1104 = vmatpush1.msra.mxu0 %v1103
    %1105 = vmatprep.subr.mxu0 0.0
    %v1106 = vand.u32 %v97, 4294901760
    %1107 = vmatpush1.msra.mxu0 %v1106
    %1108 = vmatprep.subr.mxu0 0.0
    %v1109 = vand.u32 %v98, 4294901760
    %1110 = vmatpush1.msra.mxu0 %v1109
    %1111 = vmatprep.subr.mxu0 0.0
    %v1112 = vand.u32 %v99, 4294901760
    %1113 = vmatpush1.msra.mxu0 %v1112
    %1114 = vmatprep.subr.mxu0 0.0
    %v1115 = vand.u32 %v100, 4294901760
    %1116 = vmatpush1.msra.mxu0 %v1115
    %1117 = vmatprep.subr.mxu0 0.0
    %v1118 = vand.u32 %v101, 4294901760
    %1119 = vmatpush1.msra.mxu0 %v1118
    %1120 = vmatprep.subr.mxu0 0.0
    %v1121 = vand.u32 %v102, 4294901760
    %1122 = vmatpush1.msra.mxu0 %v1121
    %1123 = vmatprep.subr.mxu0 0.0
    %v1124 = vand.u32 %v103, 4294901760
    %1125 = vmatpush1.msra.mxu0 %v1124
    %1126 = vmatprep.subr.mxu0 0.0
    %v1127 = vand.u32 %v104, 4294901760
    %1128 = vmatpush1.msra.mxu0 %v1127
    %1129 = vmatprep.subr.mxu0 0.0
    %v1130 = vand.u32 %v105, 4294901760
    %1131 = vmatpush1.msra.mxu0 %v1130
    %1132 = vmatprep.subr.mxu0 0.0
    %v1133 = vand.u32 %v106, 4294901760
    %1134 = vmatpush1.msra.mxu0 %v1133
    %1135 = vmatprep.subr.mxu0 0.0
    %v1136 = vand.u32 %v107, 4294901760
    %1137 = vmatpush1.msra.mxu0 %v1136
    %1138 = vmatprep.subr.mxu0 0.0
    %1139 = vmatpush1.msra.mxu0 0.0
    %1140 = vmatprep.subr.mxu0 0.0
    %1141 = vmatpush1.msra.mxu0 0.0
    %1142 = vmatprep.subr.mxu0 0.0
    %1143 = vmatpush1.msra.mxu0 0.0
    %1144 = vmatprep.subr.mxu0 0.0
    %1145 = vmatpush1.msra.mxu0 0.0
    %1146 = vmatprep.subr.mxu0 0.0
    %1147 = vmatpush1.msra.mxu0 0.0
    %1148 = vmatprep.subr.mxu0 0.0
    %1149 = vmatpush1.msra.mxu0 0.0
    %1150 = vmatprep.subr.mxu0 0.0
    %1151 = vmatpush1.msra.mxu0 0.0
    %1152 = vmatprep.subr.mxu0 0.0
    %1153 = vmatpush1.msra.mxu0 0.0
    %1154 = vmatprep.subr.mxu0 0.0
    %1155 = vmatpush1.msra.mxu0 0.0
    %1156 = vmatprep.subr.mxu0 0.0
    %1157 = vmatpush1.msra.mxu0 0.0
    %1158 = vmatprep.subr.mxu0 0.0
    %1159 = vmatpush1.msra.mxu0 0.0
    %1160 = vmatprep.subr.mxu0 0.0
    %1161 = vmatpush1.msra.mxu0 0.0
    %1162 = vmatprep.subr.mxu0 0.0
    %1163 = vmatpush1.msra.mxu0 0.0
    %1164 = vmatprep.subr.mxu0 0.0
    %1165 = vmatpush1.msra.mxu0 0.0
    %1166 = vmatprep.subr.mxu0 0.0
    %1167 = vmatpush1.msra.mxu0 0.0
    %1168 = vmatprep.subr.mxu0 0.0
    %1169 = vmatpush1.msra.mxu0 0.0
    %1170 = vmatprep.mubr.f32.mxu0 0.0
    %v1171 = vand.u32 %v1081, 4294901760
    %v1172 = vsub.f32 %v1081, %v1171
    %v1173 = vand.u32 %v1172, 4294901760
    %v1174 = vsub.f32 %v1172, %v1173
    %v1175 = vand.u32 %v1174, 4294901760
    %1176 = vmatmul.mubr.f32.gmra.mrb[0].mxu0 %v1175
    %v1177 = vpop.f32.mrb[0].mxu0
    %v1178 = vadd.f32 %v1088, %v1177
    %v1179 = vpop.f32.mrb[0].mxu0
    %1180 = vmatprep.mubr.f32.mxu0 0.0
    %v1181 = vand.u32 %v1082, 4294901760
    %v1182 = vsub.f32 %v1082, %v1181
    %v1183 = vand.u32 %v1182, 4294901760
    %v1184 = vsub.f32 %v1182, %v1183
    %v1185 = vand.u32 %v1184, 4294901760
    %1186 = vmatmul.mubr.f32.gmra.mrb[0].mxu0 %v1185
    %v1187 = vpop.f32.mrb[0].mxu0
    %v1188 = vadd.f32 %v1088, %v1187
    %v1189 = vpop.f32.mrb[0].mxu0
    %1190 = vmatprep.mubr.f32.mxu0 0.0
    %v1191 = vand.u32 %v1083, 4294901760
    %v1192 = vsub.f32 %v1083, %v1191
    %v1193 = vand.u32 %v1192, 4294901760
    %v1194 = vsub.f32 %v1192, %v1193
    %v1195 = vand.u32 %v1194, 4294901760
    %1196 = vmatmul.mubr.f32.gmra.mrb[0].mxu0 %v1195
    %v1197 = vpop.f32.mrb[0].mxu0
    %v1198 = vadd.f32 %v1088, %v1197
    %v1199 = vpop.f32.mrb[0].mxu0
    %1200 = vdwg.mxu0
    %1201 = vmatprep.subr.mxu0 0.0
    %v1202 = vand.u32 %v92, 4294901760
    %v1203 = vsub.f32 %v92, %v1202
    %v1204 = vand.u32 %v1203, 4294901760
    %v1205 = vsub.f32 %v1203, %v1204
    %v1206 = vand.u32 %v1205, 4294901760
    %1207 = vmatpush1.msra.mxu0 %v1206
    %1208 = vmatprep.subr.mxu0 0.0
    %v1209 = vand.u32 %v93, 4294901760
    %v1210 = vsub.f32 %v93, %v1209
    %v1211 = vand.u32 %v1210, 4294901760
    %v1212 = vsub.f32 %v1210, %v1211
    %v1213 = vand.u32 %v1212, 4294901760
    %1214 = vmatpush1.msra.mxu0 %v1213
    %1215 = vmatprep.subr.mxu0 0.0
    %v1216 = vand.u32 %v94, 4294901760
    %v1217 = vsub.f32 %v94, %v1216
    %v1218 = vand.u32 %v1217, 4294901760
    %v1219 = vsub.f32 %v1217, %v1218
    %v1220 = vand.u32 %v1219, 4294901760
    %1221 = vmatpush1.msra.mxu0 %v1220
    %1222 = vmatprep.subr.mxu0 0.0
    %v1223 = vand.u32 %v95, 4294901760
    %v1224 = vsub.f32 %v95, %v1223
    %v1225 = vand.u32 %v1224, 4294901760
    %v1226 = vsub.f32 %v1224, %v1225
    %v1227 = vand.u32 %v1226, 4294901760
    %1228 = vmatpush1.msra.mxu0 %v1227
    %1229 = vmatprep.subr.mxu0 0.0
    %v1230 = vand.u32 %v96, 4294901760
    %v1231 = vsub.f32 %v96, %v1230
    %v1232 = vand.u32 %v1231, 4294901760
    %v1233 = vsub.f32 %v1231, %v1232
    %v1234 = vand.u32 %v1233, 4294901760
    %1235 = vmatpush1.msra.mxu0 %v1234
    %1236 = vmatprep.subr.mxu0 0.0
    %v1237 = vand.u32 %v97, 4294901760
    %v1238 = vsub.f32 %v97, %v1237
    %v1239 = vand.u32 %v1238, 4294901760
    %v1240 = vsub.f32 %v1238, %v1239
    %v1241 = vand.u32 %v1240, 4294901760
    %1242 = vmatpush1.msra.mxu0 %v1241
    %1243 = vmatprep.subr.mxu0 0.0
    %v1244 = vand.u32 %v98, 4294901760
    %v1245 = vsub.f32 %v98, %v1244
    %v1246 = vand.u32 %v1245, 4294901760
    %v1247 = vsub.f32 %v1245, %v1246
    %v1248 = vand.u32 %v1247, 4294901760
    %1249 = vmatpush1.msra.mxu0 %v1248
    %1250 = vmatprep.subr.mxu0 0.0
    %v1251 = vand.u32 %v99, 4294901760
    %v1252 = vsub.f32 %v99, %v1251
    %v1253 = vand.u32 %v1252, 4294901760
    %v1254 = vsub.f32 %v1252, %v1253
    %v1255 = vand.u32 %v1254, 4294901760
    %1256 = vmatpush1.msra.mxu0 %v1255
    %1257 = vmatprep.subr.mxu0 0.0
    %v1258 = vand.u32 %v100, 4294901760
    %v1259 = vsub.f32 %v100, %v1258
    %v1260 = vand.u32 %v1259, 4294901760
    %v1261 = vsub.f32 %v1259, %v1260
    %v1262 = vand.u32 %v1261, 4294901760
    %1263 = vmatpush1.msra.mxu0 %v1262
    %1264 = vmatprep.subr.mxu0 0.0
    %v1265 = vand.u32 %v101, 4294901760
    %v1266 = vsub.f32 %v101, %v1265
    %v1267 = vand.u32 %v1266, 4294901760
    %v1268 = vsub.f32 %v1266, %v1267
    %v1269 = vand.u32 %v1268, 4294901760
    %1270 = vmatpush1.msra.mxu0 %v1269
    %1271 = vmatprep.subr.mxu0 0.0
    %v1272 = vand.u32 %v102, 4294901760
    %v1273 = vsub.f32 %v102, %v1272
    %v1274 = vand.u32 %v1273, 4294901760
    %v1275 = vsub.f32 %v1273, %v1274
    %v1276 = vand.u32 %v1275, 4294901760
    %1277 = vmatpush1.msra.mxu0 %v1276
    %1278 = vmatprep.subr.mxu0 0.0
    %v1279 = vand.u32 %v103, 4294901760
    %v1280 = vsub.f32 %v103, %v1279
    %v1281 = vand.u32 %v1280, 4294901760
    %v1282 = vsub.f32 %v1280, %v1281
    %v1283 = vand.u32 %v1282, 4294901760
    %1284 = vmatpush1.msra.mxu0 %v1283
    %1285 = vmatprep.subr.mxu0 0.0
    %v1286 = vand.u32 %v104, 4294901760
    %v1287 = vsub.f32 %v104, %v1286
    %v1288 = vand.u32 %v1287, 4294901760
    %v1289 = vsub.f32 %v1287, %v1288
    %v1290 = vand.u32 %v1289, 4294901760
    %1291 = vmatpush1.msra.mxu0 %v1290
    %1292 = vmatprep.subr.mxu0 0.0
    %v1293 = vand.u32 %v105, 4294901760
    %v1294 = vsub.f32 %v105, %v1293
    %v1295 = vand.u32 %v1294, 4294901760
    %v1296 = vsub.f32 %v1294, %v1295
    %v1297 = vand.u32 %v1296, 4294901760
    %1298 = vmatpush1.msra.mxu0 %v1297
    %1299 = vmatprep.subr.mxu0 0.0
    %v1300 = vand.u32 %v106, 4294901760
    %v1301 = vsub.f32 %v106, %v1300
    %v1302 = vand.u32 %v1301, 4294901760
    %v1303 = vsub.f32 %v1301, %v1302
    %v1304 = vand.u32 %v1303, 4294901760
    %1305 = vmatpush1.msra.mxu0 %v1304
    %1306 = vmatprep.subr.mxu0 0.0
    %v1307 = vand.u32 %v107, 4294901760
    %v1308 = vsub.f32 %v107, %v1307
    %v1309 = vand.u32 %v1308, 4294901760
    %v1310 = vsub.f32 %v1308, %v1309
    %v1311 = vand.u32 %v1310, 4294901760
    %1312 = vmatpush1.msra.mxu0 %v1311
    %1313 = vmatprep.subr.mxu0 0.0
    %1314 = vmatpush1.msra.mxu0 0.0
    %1315 = vmatprep.subr.mxu0 0.0
    %1316 = vmatpush1.msra.mxu0 0.0
    %1317 = vmatprep.subr.mxu0 0.0
    %1318 = vmatpush1.msra.mxu0 0.0
    %1319 = vmatprep.subr.mxu0 0.0
    %1320 = vmatpush1.msra.mxu0 0.0
    %1321 = vmatprep.subr.mxu0 0.0
    %1322 = vmatpush1.msra.mxu0 0.0
    %1323 = vmatprep.subr.mxu0 0.0
    %1324 = vmatpush1.msra.mxu0 0.0
    %1325 = vmatprep.subr.mxu0 0.0
    %1326 = vmatpush1.msra.mxu0 0.0
    %1327 = vmatprep.subr.mxu0 0.0
    %1328 = vmatpush1.msra.mxu0 0.0
    %1329 = vmatprep.subr.mxu0 0.0
    %1330 = vmatpush1.msra.mxu0 0.0
    %1331 = vmatprep.subr.mxu0 0.0
    %1332 = vmatpush1.msra.mxu0 0.0
    %1333 = vmatprep.subr.mxu0 0.0
    %1334 = vmatpush1.msra.mxu0 0.0
    %1335 = vmatprep.subr.mxu0 0.0
    %1336 = vmatpush1.msra.mxu0 0.0
    %1337 = vmatprep.subr.mxu0 0.0
    %1338 = vmatpush1.msra.mxu0 0.0
    %1339 = vmatprep.subr.mxu0 0.0
    %1340 = vmatpush1.msra.mxu0 0.0
    %1341 = vmatprep.subr.mxu0 0.0
    %1342 = vmatpush1.msra.mxu0 0.0
    %1343 = vmatprep.subr.mxu0 0.0
    %1344 = vmatpush1.msra.mxu0 0.0
    %1345 = vmatprep.mubr.f32.mxu0 0.0
    %v1346 = vand.u32 %v1081, 4294901760
    %1347 = vmatmul.mubr.f32.gmra.mrb[0].mxu0 %v1346
    %v1348 = vpop.f32.mrb[0].mxu0
    %v1349 = vadd.f32 %v1178, %v1348
    %v1350 = vpop.f32.mrb[0].mxu0
    %1351 = vmatprep.mubr.f32.mxu0 0.0
    %v1352 = vand.u32 %v1082, 4294901760
    %1353 = vmatmul.mubr.f32.gmra.mrb[0].mxu0 %v1352
    %v1354 = vpop.f32.mrb[0].mxu0
    %v1355 = vadd.f32 %v1188, %v1354
    %v1356 = vpop.f32.mrb[0].mxu0
    %1357 = vmatprep.mubr.f32.mxu0 0.0
    %v1358 = vand.u32 %v1083, 4294901760
    %1359 = vmatmul.mubr.f32.gmra.mrb[0].mxu0 %v1358
    %v1360 = vpop.f32.mrb[0].mxu0
    %v1361 = vadd.f32 %v1198, %v1360
    %v1362 = vpop.f32.mrb[0].mxu0
    %1363 = vdwg.mxu0
    %1364 = vmatprep.subr.mxu0 0.0
    %v1365 = vand.u32 %v92, 4294901760
    %v1366 = vsub.f32 %v92, %v1365
    %1367 = vmatpush1.msra.mxu0 %v1366
    %1368 = vmatprep.subr.mxu0 0.0
    %v1369 = vand.u32 %v93, 4294901760
    %v1370 = vsub.f32 %v93, %v1369
    %1371 = vmatpush1.msra.mxu0 %v1370
    %1372 = vmatprep.subr.mxu0 0.0
    %v1373 = vand.u32 %v94, 4294901760
    %v1374 = vsub.f32 %v94, %v1373
    %1375 = vmatpush1.msra.mxu0 %v1374
    %1376 = vmatprep.subr.mxu0 0.0
    %v1377 = vand.u32 %v95, 4294901760
    %v1378 = vsub.f32 %v95, %v1377
    %1379 = vmatpush1.msra.mxu0 %v1378
    %1380 = vmatprep.subr.mxu0 0.0
    %v1381 = vand.u32 %v96, 4294901760
    %v1382 = vsub.f32 %v96, %v1381
    %1383 = vmatpush1.msra.mxu0 %v1382
    %1384 = vmatprep.subr.mxu0 0.0
    %v1385 = vand.u32 %v97, 4294901760
    %v1386 = vsub.f32 %v97, %v1385
    %1387 = vmatpush1.msra.mxu0 %v1386
    %1388 = vmatprep.subr.mxu0 0.0
    %v1389 = vand.u32 %v98, 4294901760
    %v1390 = vsub.f32 %v98, %v1389
    %1391 = vmatpush1.msra.mxu0 %v1390
    %1392 = vmatprep.subr.mxu0 0.0
    %v1393 = vand.u32 %v99, 4294901760
    %v1394 = vsub.f32 %v99, %v1393
    %1395 = vmatpush1.msra.mxu0 %v1394
    %1396 = vmatprep.subr.mxu0 0.0
    %v1397 = vand.u32 %v100, 4294901760
    %v1398 = vsub.f32 %v100, %v1397
    %1399 = vmatpush1.msra.mxu0 %v1398
    %1400 = vmatprep.subr.mxu0 0.0
    %v1401 = vand.u32 %v101, 4294901760
    %v1402 = vsub.f32 %v101, %v1401
    %1403 = vmatpush1.msra.mxu0 %v1402
    %1404 = vmatprep.subr.mxu0 0.0
    %v1405 = vand.u32 %v102, 4294901760
    %v1406 = vsub.f32 %v102, %v1405
    %1407 = vmatpush1.msra.mxu0 %v1406
    %1408 = vmatprep.subr.mxu0 0.0
    %v1409 = vand.u32 %v103, 4294901760
    %v1410 = vsub.f32 %v103, %v1409
    %1411 = vmatpush1.msra.mxu0 %v1410
    %1412 = vmatprep.subr.mxu0 0.0
    %v1413 = vand.u32 %v104, 4294901760
    %v1414 = vsub.f32 %v104, %v1413
    %1415 = vmatpush1.msra.mxu0 %v1414
    %1416 = vmatprep.subr.mxu0 0.0
    %v1417 = vand.u32 %v105, 4294901760
    %v1418 = vsub.f32 %v105, %v1417
    %1419 = vmatpush1.msra.mxu0 %v1418
    %1420 = vmatprep.subr.mxu0 0.0
    %v1421 = vand.u32 %v106, 4294901760
    %v1422 = vsub.f32 %v106, %v1421
    %1423 = vmatpush1.msra.mxu0 %v1422
    %1424 = vmatprep.subr.mxu0 0.0
    %v1425 = vand.u32 %v107, 4294901760
    %v1426 = vsub.f32 %v107, %v1425
    %1427 = vmatpush1.msra.mxu0 %v1426
    %1428 = vmatprep.subr.mxu0 0.0
    %1429 = vmatpush1.msra.mxu0 0.0
    %1430 = vmatprep.subr.mxu0 0.0
    %1431 = vmatpush1.msra.mxu0 0.0
    %1432 = vmatprep.subr.mxu0 0.0
    %1433 = vmatpush1.msra.mxu0 0.0
    %1434 = vmatprep.subr.mxu0 0.0
    %1435 = vmatpush1.msra.mxu0 0.0
    %1436 = vmatprep.subr.mxu0 0.0
    %1437 = vmatpush1.msra.mxu0 0.0
    %1438 = vmatprep.subr.mxu0 0.0
    %1439 = vmatpush1.msra.mxu0 0.0
    %1440 = vmatprep.subr.mxu0 0.0
    %1441 = vmatpush1.msra.mxu0 0.0
    %1442 = vmatprep.subr.mxu0 0.0
    %1443 = vmatpush1.msra.mxu0 0.0
    %1444 = vmatprep.subr.mxu0 0.0
    %1445 = vmatpush1.msra.mxu0 0.0
    %1446 = vmatprep.subr.mxu0 0.0
    %1447 = vmatpush1.msra.mxu0 0.0
    %1448 = vmatprep.subr.mxu0 0.0
    %1449 = vmatpush1.msra.mxu0 0.0
    %1450 = vmatprep.subr.mxu0 0.0
    %1451 = vmatpush1.msra.mxu0 0.0
    %1452 = vmatprep.subr.mxu0 0.0
    %1453 = vmatpush1.msra.mxu0 0.0
    %1454 = vmatprep.subr.mxu0 0.0
    %1455 = vmatpush1.msra.mxu0 0.0
    %1456 = vmatprep.subr.mxu0 0.0
    %1457 = vmatpush1.msra.mxu0 0.0
    %1458 = vmatprep.subr.mxu0 0.0
    %1459 = vmatpush1.msra.mxu0 0.0
    %1460 = vmatprep.mubr.f32.mxu0 0.0
    %v1461 = vand.u32 %v1081, 4294901760
    %v1462 = vsub.f32 %v1081, %v1461
    %1463 = vmatmul.mubr.f32.gmra.mrb[0].mxu0 %v1462
    %v1464 = vpop.f32.mrb[0].mxu0
    %v1465 = vadd.f32 %v1349, %v1464
    %v1466 = vpop.f32.mrb[0].mxu0
    %1467 = vmatprep.mubr.f32.mxu0 0.0
    %v1468 = vand.u32 %v1082, 4294901760
    %v1469 = vsub.f32 %v1082, %v1468
    %1470 = vmatmul.mubr.f32.gmra.mrb[0].mxu0 %v1469
    %v1471 = vpop.f32.mrb[0].mxu0
    %v1472 = vadd.f32 %v1355, %v1471
    %v1473 = vpop.f32.mrb[0].mxu0
    %1474 = vmatprep.mubr.f32.mxu0 0.0
    %v1475 = vand.u32 %v1083, 4294901760
    %v1476 = vsub.f32 %v1083, %v1475
    %1477 = vmatmul.mubr.f32.gmra.mrb[0].mxu0 %v1476
    %v1478 = vpop.f32.mrb[0].mxu0
    %v1479 = vadd.f32 %v1361, %v1478
    %v1480 = vpop.f32.mrb[0].mxu0
    %1481 = vdwg.mxu0
    %1482 = vmatprep.subr.mxu0 0.0
    %v1483 = vand.u32 %v92, 4294901760
    %1484 = vmatpush1.msra.mxu0 %v1483
    %1485 = vmatprep.subr.mxu0 0.0
    %v1486 = vand.u32 %v93, 4294901760
    %1487 = vmatpush1.msra.mxu0 %v1486
    %1488 = vmatprep.subr.mxu0 0.0
    %v1489 = vand.u32 %v94, 4294901760
    %1490 = vmatpush1.msra.mxu0 %v1489
    %1491 = vmatprep.subr.mxu0 0.0
    %v1492 = vand.u32 %v95, 4294901760
    %1493 = vmatpush1.msra.mxu0 %v1492
    %1494 = vmatprep.subr.mxu0 0.0
    %v1495 = vand.u32 %v96, 4294901760
    %1496 = vmatpush1.msra.mxu0 %v1495
    %1497 = vmatprep.subr.mxu0 0.0
    %v1498 = vand.u32 %v97, 4294901760
    %1499 = vmatpush1.msra.mxu0 %v1498
    %1500 = vmatprep.subr.mxu0 0.0
    %v1501 = vand.u32 %v98, 4294901760
    %1502 = vmatpush1.msra.mxu0 %v1501
    %1503 = vmatprep.subr.mxu0 0.0
    %v1504 = vand.u32 %v99, 4294901760
    %1505 = vmatpush1.msra.mxu0 %v1504
    %1506 = vmatprep.subr.mxu0 0.0
    %v1507 = vand.u32 %v100, 4294901760
    %1508 = vmatpush1.msra.mxu0 %v1507
    %1509 = vmatprep.subr.mxu0 0.0
    %v1510 = vand.u32 %v101, 4294901760
    %1511 = vmatpush1.msra.mxu0 %v1510
    %1512 = vmatprep.subr.mxu0 0.0
    %v1513 = vand.u32 %v102, 4294901760
    %1514 = vmatpush1.msra.mxu0 %v1513
    %1515 = vmatprep.subr.mxu0 0.0
    %v1516 = vand.u32 %v103, 4294901760
    %1517 = vmatpush1.msra.mxu0 %v1516
    %1518 = vmatprep.subr.mxu0 0.0
    %v1519 = vand.u32 %v104, 4294901760
    %1520 = vmatpush1.msra.mxu0 %v1519
    %1521 = vmatprep.subr.mxu0 0.0
    %v1522 = vand.u32 %v105, 4294901760
    %1523 = vmatpush1.msra.mxu0 %v1522
    %1524 = vmatprep.subr.mxu0 0.0
    %v1525 = vand.u32 %v106, 4294901760
    %1526 = vmatpush1.msra.mxu0 %v1525
    %1527 = vmatprep.subr.mxu0 0.0
    %v1528 = vand.u32 %v107, 4294901760
    %1529 = vmatpush1.msra.mxu0 %v1528
    %1530 = vmatprep.subr.mxu0 0.0
    %1531 = vmatpush1.msra.mxu0 0.0
    %1532 = vmatprep.subr.mxu0 0.0
    %1533 = vmatpush1.msra.mxu0 0.0
    %1534 = vmatprep.subr.mxu0 0.0
    %1535 = vmatpush1.msra.mxu0 0.0
    %1536 = vmatprep.subr.mxu0 0.0
    %1537 = vmatpush1.msra.mxu0 0.0
    %1538 = vmatprep.subr.mxu0 0.0
    %1539 = vmatpush1.msra.mxu0 0.0
    %1540 = vmatprep.subr.mxu0 0.0
    %1541 = vmatpush1.msra.mxu0 0.0
    %1542 = vmatprep.subr.mxu0 0.0
    %1543 = vmatpush1.msra.mxu0 0.0
    %1544 = vmatprep.subr.mxu0 0.0
    %1545 = vmatpush1.msra.mxu0 0.0
    %1546 = vmatprep.subr.mxu0 0.0
    %1547 = vmatpush1.msra.mxu0 0.0
    %1548 = vmatprep.subr.mxu0 0.0
    %1549 = vmatpush1.msra.mxu0 0.0
    %1550 = vmatprep.subr.mxu0 0.0
    %1551 = vmatpush1.msra.mxu0 0.0
    %1552 = vmatprep.subr.mxu0 0.0
    %1553 = vmatpush1.msra.mxu0 0.0
    %1554 = vmatprep.subr.mxu0 0.0
    %1555 = vmatpush1.msra.mxu0 0.0
    %1556 = vmatprep.subr.mxu0 0.0
    %1557 = vmatpush1.msra.mxu0 0.0
    %1558 = vmatprep.subr.mxu0 0.0
    %1559 = vmatpush1.msra.mxu0 0.0
    %1560 = vmatprep.subr.mxu0 0.0
    %1561 = vmatpush1.msra.mxu0 0.0
    %1562 = vmatprep.mubr.f32.mxu0 0.0
    %v1563 = vand.u32 %v1081, 4294901760
    %v1564 = vsub.f32 %v1081, %v1563
    %v1565 = vand.u32 %v1564, 4294901760
    %1566 = vmatmul.mubr.f32.gmra.mrb[0].mxu0 %v1565
    %v1567 = vpop.f32.mrb[0].mxu0
    %v1568 = vadd.f32 %v1465, %v1567
    %v1569 = vpop.f32.mrb[0].mxu0
    %1570 = vmatprep.mubr.f32.mxu0 0.0
    %v1571 = vand.u32 %v1082, 4294901760
    %v1572 = vsub.f32 %v1082, %v1571
    %v1573 = vand.u32 %v1572, 4294901760
    %1574 = vmatmul.mubr.f32.gmra.mrb[0].mxu0 %v1573
    %v1575 = vpop.f32.mrb[0].mxu0
    %v1576 = vadd.f32 %v1472, %v1575
    %v1577 = vpop.f32.mrb[0].mxu0
    %1578 = vmatprep.mubr.f32.mxu0 0.0
    %v1579 = vand.u32 %v1083, 4294901760
    %v1580 = vsub.f32 %v1083, %v1579
    %v1581 = vand.u32 %v1580, 4294901760
    %1582 = vmatmul.mubr.f32.gmra.mrb[0].mxu0 %v1581
    %v1583 = vpop.f32.mrb[0].mxu0
    %v1584 = vadd.f32 %v1479, %v1583
    %v1585 = vpop.f32.mrb[0].mxu0
    %1586 = vdwg.mxu0
    %1587 = vmatprep.subr.mxu0 0.0
    %v1588 = vand.u32 %v92, 4294901760
    %v1589 = vsub.f32 %v92, %v1588
    %v1590 = vand.u32 %v1589, 4294901760
    %1591 = vmatpush1.msra.mxu0 %v1590
    %1592 = vmatprep.subr.mxu0 0.0
    %v1593 = vand.u32 %v93, 4294901760
    %v1594 = vsub.f32 %v93, %v1593
    %v1595 = vand.u32 %v1594, 4294901760
    %1596 = vmatpush1.msra.mxu0 %v1595
    %1597 = vmatprep.subr.mxu0 0.0
    %v1598 = vand.u32 %v94, 4294901760
    %v1599 = vsub.f32 %v94, %v1598
    %v1600 = vand.u32 %v1599, 4294901760
    %1601 = vmatpush1.msra.mxu0 %v1600
    %1602 = vmatprep.subr.mxu0 0.0
    %v1603 = vand.u32 %v95, 4294901760
    %v1604 = vsub.f32 %v95, %v1603
    %v1605 = vand.u32 %v1604, 4294901760
    %1606 = vmatpush1.msra.mxu0 %v1605
    %1607 = vmatprep.subr.mxu0 0.0
    %v1608 = vand.u32 %v96, 4294901760
    %v1609 = vsub.f32 %v96, %v1608
    %v1610 = vand.u32 %v1609, 4294901760
    %1611 = vmatpush1.msra.mxu0 %v1610
    %1612 = vmatprep.subr.mxu0 0.0
    %v1613 = vand.u32 %v97, 4294901760
    %v1614 = vsub.f32 %v97, %v1613
    %v1615 = vand.u32 %v1614, 4294901760
    %1616 = vmatpush1.msra.mxu0 %v1615
    %1617 = vmatprep.subr.mxu0 0.0
    %v1618 = vand.u32 %v98, 4294901760
    %v1619 = vsub.f32 %v98, %v1618
    %v1620 = vand.u32 %v1619, 4294901760
    %1621 = vmatpush1.msra.mxu0 %v1620
    %1622 = vmatprep.subr.mxu0 0.0
    %v1623 = vand.u32 %v99, 4294901760
    %v1624 = vsub.f32 %v99, %v1623
    %v1625 = vand.u32 %v1624, 4294901760
    %1626 = vmatpush1.msra.mxu0 %v1625
    %1627 = vmatprep.subr.mxu0 0.0
    %v1628 = vand.u32 %v100, 4294901760
    %v1629 = vsub.f32 %v100, %v1628
    %v1630 = vand.u32 %v1629, 4294901760
    %1631 = vmatpush1.msra.mxu0 %v1630
    %1632 = vmatprep.subr.mxu0 0.0
    %v1633 = vand.u32 %v101, 4294901760
    %v1634 = vsub.f32 %v101, %v1633
    %v1635 = vand.u32 %v1634, 4294901760
    %1636 = vmatpush1.msra.mxu0 %v1635
    %1637 = vmatprep.subr.mxu0 0.0
    %v1638 = vand.u32 %v102, 4294901760
    %v1639 = vsub.f32 %v102, %v1638
    %v1640 = vand.u32 %v1639, 4294901760
    %1641 = vmatpush1.msra.mxu0 %v1640
    %1642 = vmatprep.subr.mxu0 0.0
    %v1643 = vand.u32 %v103, 4294901760
    %v1644 = vsub.f32 %v103, %v1643
    %v1645 = vand.u32 %v1644, 4294901760
    %1646 = vmatpush1.msra.mxu0 %v1645
    %1647 = vmatprep.subr.mxu0 0.0
    %v1648 = vand.u32 %v104, 4294901760
    %v1649 = vsub.f32 %v104, %v1648
    %v1650 = vand.u32 %v1649, 4294901760
    %1651 = vmatpush1.msra.mxu0 %v1650
    %1652 = vmatprep.subr.mxu0 0.0
    %v1653 = vand.u32 %v105, 4294901760
    %v1654 = vsub.f32 %v105, %v1653
    %v1655 = vand.u32 %v1654, 4294901760
    %1656 = vmatpush1.msra.mxu0 %v1655
    %1657 = vmatprep.subr.mxu0 0.0
    %v1658 = vand.u32 %v106, 4294901760
    %v1659 = vsub.f32 %v106, %v1658
    %v1660 = vand.u32 %v1659, 4294901760
    %1661 = vmatpush1.msra.mxu0 %v1660
    %1662 = vmatprep.subr.mxu0 0.0
    %v1663 = vand.u32 %v107, 4294901760
    %v1664 = vsub.f32 %v107, %v1663
    %v1665 = vand.u32 %v1664, 4294901760
    %1666 = vmatpush1.msra.mxu0 %v1665
    %1667 = vmatprep.subr.mxu0 0.0
    %1668 = vmatpush1.msra.mxu0 0.0
    %1669 = vmatprep.subr.mxu0 0.0
    %1670 = vmatpush1.msra.mxu0 0.0
    %1671 = vmatprep.subr.mxu0 0.0
    %1672 = vmatpush1.msra.mxu0 0.0
    %1673 = vmatprep.subr.mxu0 0.0
    %1674 = vmatpush1.msra.mxu0 0.0
    %1675 = vmatprep.subr.mxu0 0.0
    %1676 = vmatpush1.msra.mxu0 0.0
    %1677 = vmatprep.subr.mxu0 0.0
    %1678 = vmatpush1.msra.mxu0 0.0
    %1679 = vmatprep.subr.mxu0 0.0
    %1680 = vmatpush1.msra.mxu0 0.0
    %1681 = vmatprep.subr.mxu0 0.0
    %1682 = vmatpush1.msra.mxu0 0.0
    %1683 = vmatprep.subr.mxu0 0.0
    %1684 = vmatpush1.msra.mxu0 0.0
    %1685 = vmatprep.subr.mxu0 0.0
    %1686 = vmatpush1.msra.mxu0 0.0
    %1687 = vmatprep.subr.mxu0 0.0
    %1688 = vmatpush1.msra.mxu0 0.0
    %1689 = vmatprep.subr.mxu0 0.0
    %1690 = vmatpush1.msra.mxu0 0.0
    %1691 = vmatprep.subr.mxu0 0.0
    %1692 = vmatpush1.msra.mxu0 0.0
    %1693 = vmatprep.subr.mxu0 0.0
    %1694 = vmatpush1.msra.mxu0 0.0
    %1695 = vmatprep.subr.mxu0 0.0
    %1696 = vmatpush1.msra.mxu0 0.0
    %1697 = vmatprep.subr.mxu0 0.0
    %1698 = vmatpush1.msra.mxu0 0.0
    %1699 = vmatprep.mubr.f32.mxu0 0.0
    %v1700 = vand.u32 %v1081, 4294901760
    %1701 = vmatmul.mubr.f32.gmra.mrb[0].mxu0 %v1700
    %v1702 = vpop.f32.mrb[0].mxu0
    %v1703 = vadd.f32 %v1568, %v1702
    %v1704 = vpop.f32.mrb[0].mxu0
    %1705 = vmatprep.mubr.f32.mxu0 0.0
    %v1706 = vand.u32 %v1082, 4294901760
    %1707 = vmatmul.mubr.f32.gmra.mrb[0].mxu0 %v1706
    %v1708 = vpop.f32.mrb[0].mxu0
    %v1709 = vadd.f32 %v1576, %v1708
    %v1710 = vpop.f32.mrb[0].mxu0
    %1711 = vmatprep.mubr.f32.mxu0 0.0
    %v1712 = vand.u32 %v1083, 4294901760
    %1713 = vmatmul.mubr.f32.gmra.mrb[0].mxu0 %v1712
    %v1714 = vpop.f32.mrb[0].mxu0
    %v1715 = vadd.f32 %v1584, %v1714
    %v1716 = vpop.f32.mrb[0].mxu0
    %1717 = vdwg.mxu0
    %1718 = vmatprep.subr.mxu0 0.0
    %v1719 = vand.u32 %v92, 4294901760
    %1720 = vmatpush1.msra.mxu0 %v1719
    %1721 = vmatprep.subr.mxu0 0.0
    %v1722 = vand.u32 %v93, 4294901760
    %1723 = vmatpush1.msra.mxu0 %v1722
    %1724 = vmatprep.subr.mxu0 0.0
    %v1725 = vand.u32 %v94, 4294901760
    %1726 = vmatpush1.msra.mxu0 %v1725
    %1727 = vmatprep.subr.mxu0 0.0
    %v1728 = vand.u32 %v95, 4294901760
    %1729 = vmatpush1.msra.mxu0 %v1728
    %1730 = vmatprep.subr.mxu0 0.0
    %v1731 = vand.u32 %v96, 4294901760
    %1732 = vmatpush1.msra.mxu0 %v1731
    %1733 = vmatprep.subr.mxu0 0.0
    %v1734 = vand.u32 %v97, 4294901760
    %1735 = vmatpush1.msra.mxu0 %v1734
    %1736 = vmatprep.subr.mxu0 0.0
    %v1737 = vand.u32 %v98, 4294901760
    %1738 = vmatpush1.msra.mxu0 %v1737
    %1739 = vmatprep.subr.mxu0 0.0
    %v1740 = vand.u32 %v99, 4294901760
    %1741 = vmatpush1.msra.mxu0 %v1740
    %1742 = vmatprep.subr.mxu0 0.0
    %v1743 = vand.u32 %v100, 4294901760
    %1744 = vmatpush1.msra.mxu0 %v1743
    %1745 = vmatprep.subr.mxu0 0.0
    %v1746 = vand.u32 %v101, 4294901760
    %1747 = vmatpush1.msra.mxu0 %v1746
    %1748 = vmatprep.subr.mxu0 0.0
    %v1749 = vand.u32 %v102, 4294901760
    %1750 = vmatpush1.msra.mxu0 %v1749
    %1751 = vmatprep.subr.mxu0 0.0
    %v1752 = vand.u32 %v103, 4294901760
    %1753 = vmatpush1.msra.mxu0 %v1752
    %1754 = vmatprep.subr.mxu0 0.0
    %v1755 = vand.u32 %v104, 4294901760
    %1756 = vmatpush1.msra.mxu0 %v1755
    %1757 = vmatprep.subr.mxu0 0.0
    %v1758 = vand.u32 %v105, 4294901760
    %1759 = vmatpush1.msra.mxu0 %v1758
    %1760 = vmatprep.subr.mxu0 0.0
    %v1761 = vand.u32 %v106, 4294901760
    %1762 = vmatpush1.msra.mxu0 %v1761
    %1763 = vmatprep.subr.mxu0 0.0
    %v1764 = vand.u32 %v107, 4294901760
    %1765 = vmatpush1.msra.mxu0 %v1764
    %1766 = vmatprep.subr.mxu0 0.0
    %1767 = vmatpush1.msra.mxu0 0.0
    %1768 = vmatprep.subr.mxu0 0.0
    %1769 = vmatpush1.msra.mxu0 0.0
    %1770 = vmatprep.subr.mxu0 0.0
    %1771 = vmatpush1.msra.mxu0 0.0
    %1772 = vmatprep.subr.mxu0 0.0
    %1773 = vmatpush1.msra.mxu0 0.0
    %1774 = vmatprep.subr.mxu0 0.0
    %1775 = vmatpush1.msra.mxu0 0.0
    %1776 = vmatprep.subr.mxu0 0.0
    %1777 = vmatpush1.msra.mxu0 0.0
    %1778 = vmatprep.subr.mxu0 0.0
    %1779 = vmatpush1.msra.mxu0 0.0
    %1780 = vmatprep.subr.mxu0 0.0
    %1781 = vmatpush1.msra.mxu0 0.0
    %1782 = vmatprep.subr.mxu0 0.0
    %1783 = vmatpush1.msra.mxu0 0.0
    %1784 = vmatprep.subr.mxu0 0.0
    %1785 = vmatpush1.msra.mxu0 0.0
    %1786 = vmatprep.subr.mxu0 0.0
    %1787 = vmatpush1.msra.mxu0 0.0
    %1788 = vmatprep.subr.mxu0 0.0
    %1789 = vmatpush1.msra.mxu0 0.0
    %1790 = vmatprep.subr.mxu0 0.0
    %1791 = vmatpush1.msra.mxu0 0.0
    %1792 = vmatprep.subr.mxu0 0.0
    %1793 = vmatpush1.msra.mxu0 0.0
    %1794 = vmatprep.subr.mxu0 0.0
    %1795 = vmatpush1.msra.mxu0 0.0
    %1796 = vmatprep.subr.mxu0 0.0
    %1797 = vmatpush1.msra.mxu0 0.0
    %1798 = vmatprep.mubr.f32.mxu0 0.0
    %v1799 = vand.u32 %v1081, 4294901760
    %1800 = vmatmul.mubr.f32.gmra.mrb[0].mxu0 %v1799
    %v1801 = vpop.f32.mrb[0].mxu0
    %v1802 = vadd.f32 %v1703, %v1801
    %v1803 = vpop.f32.mrb[0].mxu0
    %1804 = vmatprep.mubr.f32.mxu0 0.0
    %v1805 = vand.u32 %v1082, 4294901760
    %1806 = vmatmul.mubr.f32.gmra.mrb[0].mxu0 %v1805
    %v1807 = vpop.f32.mrb[0].mxu0
    %v1808 = vadd.f32 %v1709, %v1807
    %v1809 = vpop.f32.mrb[0].mxu0
    %1810 = vmatprep.mubr.f32.mxu0 0.0
    %v1811 = vand.u32 %v1083, 4294901760
    %1812 = vmatmul.mubr.f32.gmra.mrb[0].mxu0 %v1811
    %v1813 = vpop.f32.mrb[0].mxu0
    %v1814 = vadd.f32 %v1715, %v1813
    %v1815 = vpop.f32.mrb[0].mxu0
    %1816 = vdwg.mxu0
    %v1817 = vmul.f32 %v1802, 0.5
    %v1818 = vmul.f32 %v1808, 0.5
    %v1819 = vmul.f32 %v1814, 0.5
    %v1820 = vtanh.pop %v1817
    %v1821 = vtanh.pop %v1818
    %v1822 = vtanh.pop %v1819
    %v1823 = vmul.f32 %v1820, 0.5
    %v1824 = vmul.f32 %v1821, 0.5
    %v1825 = vmul.f32 %v1822, 0.5
    %v1826 = vadd.f32 %v1823, 0.5
    %v1827 = vadd.f32 %v1824, 0.5
    %v1828 = vadd.f32 %v1825, 0.5
    %v1830 = vlaneseq
    %v1831 = vshrl.u32 %v1830, 7
    %v1832 = vsub.s32 0, %v1831
    %v1833 = vrot.slane %v125, %v1832
    %1835 = vmatprep.subr.mxu0 0.0
    %v1836 = vand.u32 %v109, 4294901760
    %1837 = vmatpush1.msra.mxu0 %v1836
    %1838 = vmatprep.subr.mxu0 0.0
    %v1839 = vand.u32 %v110, 4294901760
    %1840 = vmatpush1.msra.mxu0 %v1839
    %1841 = vmatprep.subr.mxu0 0.0
    %v1842 = vand.u32 %v111, 4294901760
    %1843 = vmatpush1.msra.mxu0 %v1842
    %1844 = vmatprep.subr.mxu0 0.0
    %v1845 = vand.u32 %v112, 4294901760
    %1846 = vmatpush1.msra.mxu0 %v1845
    %1847 = vmatprep.subr.mxu0 0.0
    %v1848 = vand.u32 %v113, 4294901760
    %1849 = vmatpush1.msra.mxu0 %v1848
    %1850 = vmatprep.subr.mxu0 0.0
    %v1851 = vand.u32 %v114, 4294901760
    %1852 = vmatpush1.msra.mxu0 %v1851
    %1853 = vmatprep.subr.mxu0 0.0
    %v1854 = vand.u32 %v115, 4294901760
    %1855 = vmatpush1.msra.mxu0 %v1854
    %1856 = vmatprep.subr.mxu0 0.0
    %v1857 = vand.u32 %v116, 4294901760
    %1858 = vmatpush1.msra.mxu0 %v1857
    %1859 = vmatprep.subr.mxu0 0.0
    %v1860 = vand.u32 %v117, 4294901760
    %1861 = vmatpush1.msra.mxu0 %v1860
    %1862 = vmatprep.subr.mxu0 0.0
    %v1863 = vand.u32 %v118, 4294901760
    %1864 = vmatpush1.msra.mxu0 %v1863
    %1865 = vmatprep.subr.mxu0 0.0
    %v1866 = vand.u32 %v119, 4294901760
    %1867 = vmatpush1.msra.mxu0 %v1866
    %1868 = vmatprep.subr.mxu0 0.0
    %v1869 = vand.u32 %v120, 4294901760
    %1870 = vmatpush1.msra.mxu0 %v1869
    %1871 = vmatprep.subr.mxu0 0.0
    %v1872 = vand.u32 %v121, 4294901760
    %1873 = vmatpush1.msra.mxu0 %v1872
    %1874 = vmatprep.subr.mxu0 0.0
    %v1875 = vand.u32 %v122, 4294901760
    %1876 = vmatpush1.msra.mxu0 %v1875
    %1877 = vmatprep.subr.mxu0 0.0
    %v1878 = vand.u32 %v123, 4294901760
    %1879 = vmatpush1.msra.mxu0 %v1878
    %1880 = vmatprep.subr.mxu0 0.0
    %v1881 = vand.u32 %v124, 4294901760
    %1882 = vmatpush1.msra.mxu0 %v1881
    %1883 = vmatprep.subr.mxu0 0.0
    %1884 = vmatpush1.msra.mxu0 0.0
    %1885 = vmatprep.subr.mxu0 0.0
    %1886 = vmatpush1.msra.mxu0 0.0
    %1887 = vmatprep.subr.mxu0 0.0
    %1888 = vmatpush1.msra.mxu0 0.0
    %1889 = vmatprep.subr.mxu0 0.0
    %1890 = vmatpush1.msra.mxu0 0.0
    %1891 = vmatprep.subr.mxu0 0.0
    %1892 = vmatpush1.msra.mxu0 0.0
    %1893 = vmatprep.subr.mxu0 0.0
    %1894 = vmatpush1.msra.mxu0 0.0
    %1895 = vmatprep.subr.mxu0 0.0
    %1896 = vmatpush1.msra.mxu0 0.0
    %1897 = vmatprep.subr.mxu0 0.0
    %1898 = vmatpush1.msra.mxu0 0.0
    %1899 = vmatprep.subr.mxu0 0.0
    %1900 = vmatpush1.msra.mxu0 0.0
    %1901 = vmatprep.subr.mxu0 0.0
    %1902 = vmatpush1.msra.mxu0 0.0
    %1903 = vmatprep.subr.mxu0 0.0
    %1904 = vmatpush1.msra.mxu0 0.0
    %1905 = vmatprep.subr.mxu0 0.0
    %1906 = vmatpush1.msra.mxu0 0.0
    %1907 = vmatprep.subr.mxu0 0.0
    %1908 = vmatpush1.msra.mxu0 0.0
    %1909 = vmatprep.subr.mxu0 0.0
    %1910 = vmatpush1.msra.mxu0 0.0
    %1911 = vmatprep.subr.mxu0 0.0
    %1912 = vmatpush1.msra.mxu0 0.0
    %1913 = vmatprep.subr.mxu0 0.0
    %1914 = vmatpush1.msra.mxu0 0.0
    %1915 = vmatprep.mubr.f32.mxu0 0.0
    %v1916 = vand.u32 %v1826, 4294901760
    %v1917 = vsub.f32 %v1826, %v1916
    %v1918 = vand.u32 %v1917, 4294901760
    %v1919 = vsub.f32 %v1917, %v1918
    %v1920 = vand.u32 %v1919, 4294901760
    %1921 = vmatmul.mubr.f32.gmra.mrb[0].mxu0 %v1920
    %v1922 = vpop.f32.mrb[0].mxu0
    %v1923 = vadd.f32 %v1833, %v1922
    %v1924 = vpop.f32.mrb[0].mxu0
    %1925 = vmatprep.mubr.f32.mxu0 0.0
    %v1926 = vand.u32 %v1827, 4294901760
    %v1927 = vsub.f32 %v1827, %v1926
    %v1928 = vand.u32 %v1927, 4294901760
    %v1929 = vsub.f32 %v1927, %v1928
    %v1930 = vand.u32 %v1929, 4294901760
    %1931 = vmatmul.mubr.f32.gmra.mrb[0].mxu0 %v1930
    %v1932 = vpop.f32.mrb[0].mxu0
    %v1933 = vadd.f32 %v1833, %v1932
    %v1934 = vpop.f32.mrb[0].mxu0
    %1935 = vmatprep.mubr.f32.mxu0 0.0
    %v1936 = vand.u32 %v1828, 4294901760
    %v1937 = vsub.f32 %v1828, %v1936
    %v1938 = vand.u32 %v1937, 4294901760
    %v1939 = vsub.f32 %v1937, %v1938
    %v1940 = vand.u32 %v1939, 4294901760
    %1941 = vmatmul.mubr.f32.gmra.mrb[0].mxu0 %v1940
    %v1942 = vpop.f32.mrb[0].mxu0
    %v1943 = vadd.f32 %v1833, %v1942
    %v1944 = vpop.f32.mrb[0].mxu0
    %1945 = vdwg.mxu0
    %1946 = vmatprep.subr.mxu0 0.0
    %v1947 = vand.u32 %v109, 4294901760
    %v1948 = vsub.f32 %v109, %v1947
    %v1949 = vand.u32 %v1948, 4294901760
    %v1950 = vsub.f32 %v1948, %v1949
    %v1951 = vand.u32 %v1950, 4294901760
    %1952 = vmatpush1.msra.mxu0 %v1951
    %1953 = vmatprep.subr.mxu0 0.0
    %v1954 = vand.u32 %v110, 4294901760
    %v1955 = vsub.f32 %v110, %v1954
    %v1956 = vand.u32 %v1955, 4294901760
    %v1957 = vsub.f32 %v1955, %v1956
    %v1958 = vand.u32 %v1957, 4294901760
    %1959 = vmatpush1.msra.mxu0 %v1958
    %1960 = vmatprep.subr.mxu0 0.0
    %v1961 = vand.u32 %v111, 4294901760
    %v1962 = vsub.f32 %v111, %v1961
    %v1963 = vand.u32 %v1962, 4294901760
    %v1964 = vsub.f32 %v1962, %v1963
    %v1965 = vand.u32 %v1964, 4294901760
    %1966 = vmatpush1.msra.mxu0 %v1965
    %1967 = vmatprep.subr.mxu0 0.0
    %v1968 = vand.u32 %v112, 4294901760
    %v1969 = vsub.f32 %v112, %v1968
    %v1970 = vand.u32 %v1969, 4294901760
    %v1971 = vsub.f32 %v1969, %v1970
    %v1972 = vand.u32 %v1971, 4294901760
    %1973 = vmatpush1.msra.mxu0 %v1972
    %1974 = vmatprep.subr.mxu0 0.0
    %v1975 = vand.u32 %v113, 4294901760
    %v1976 = vsub.f32 %v113, %v1975
    %v1977 = vand.u32 %v1976, 4294901760
    %v1978 = vsub.f32 %v1976, %v1977
    %v1979 = vand.u32 %v1978, 4294901760
    %1980 = vmatpush1.msra.mxu0 %v1979
    %1981 = vmatprep.subr.mxu0 0.0
    %v1982 = vand.u32 %v114, 4294901760
    %v1983 = vsub.f32 %v114, %v1982
    %v1984 = vand.u32 %v1983, 4294901760
    %v1985 = vsub.f32 %v1983, %v1984
    %v1986 = vand.u32 %v1985, 4294901760
    %1987 = vmatpush1.msra.mxu0 %v1986
    %1988 = vmatprep.subr.mxu0 0.0
    %v1989 = vand.u32 %v115, 4294901760
    %v1990 = vsub.f32 %v115, %v1989
    %v1991 = vand.u32 %v1990, 4294901760
    %v1992 = vsub.f32 %v1990, %v1991
    %v1993 = vand.u32 %v1992, 4294901760
    %1994 = vmatpush1.msra.mxu0 %v1993
    %1995 = vmatprep.subr.mxu0 0.0
    %v1996 = vand.u32 %v116, 4294901760
    %v1997 = vsub.f32 %v116, %v1996
    %v1998 = vand.u32 %v1997, 4294901760
    %v1999 = vsub.f32 %v1997, %v1998
    %v2000 = vand.u32 %v1999, 4294901760
    %2001 = vmatpush1.msra.mxu0 %v2000
    %2002 = vmatprep.subr.mxu0 0.0
    %v2003 = vand.u32 %v117, 4294901760
    %v2004 = vsub.f32 %v117, %v2003
    %v2005 = vand.u32 %v2004, 4294901760
    %v2006 = vsub.f32 %v2004, %v2005
    %v2007 = vand.u32 %v2006, 4294901760
    %2008 = vmatpush1.msra.mxu0 %v2007
    %2009 = vmatprep.subr.mxu0 0.0
    %v2010 = vand.u32 %v118, 4294901760
    %v2011 = vsub.f32 %v118, %v2010
    %v2012 = vand.u32 %v2011, 4294901760
    %v2013 = vsub.f32 %v2011, %v2012
    %v2014 = vand.u32 %v2013, 4294901760
    %2015 = vmatpush1.msra.mxu0 %v2014
    %2016 = vmatprep.subr.mxu0 0.0
    %v2017 = vand.u32 %v119, 4294901760
    %v2018 = vsub.f32 %v119, %v2017
    %v2019 = vand.u32 %v2018, 4294901760
    %v2020 = vsub.f32 %v2018, %v2019
    %v2021 = vand.u32 %v2020, 4294901760
    %2022 = vmatpush1.msra.mxu0 %v2021
    %2023 = vmatprep.subr.mxu0 0.0
    %v2024 = vand.u32 %v120, 4294901760
    %v2025 = vsub.f32 %v120, %v2024
    %v2026 = vand.u32 %v2025, 4294901760
    %v2027 = vsub.f32 %v2025, %v2026
    %v2028 = vand.u32 %v2027, 4294901760
    %2029 = vmatpush1.msra.mxu0 %v2028
    %2030 = vmatprep.subr.mxu0 0.0
    %v2031 = vand.u32 %v121, 4294901760
    %v2032 = vsub.f32 %v121, %v2031
    %v2033 = vand.u32 %v2032, 4294901760
    %v2034 = vsub.f32 %v2032, %v2033
    %v2035 = vand.u32 %v2034, 4294901760
    %2036 = vmatpush1.msra.mxu0 %v2035
    %2037 = vmatprep.subr.mxu0 0.0
    %v2038 = vand.u32 %v122, 4294901760
    %v2039 = vsub.f32 %v122, %v2038
    %v2040 = vand.u32 %v2039, 4294901760
    %v2041 = vsub.f32 %v2039, %v2040
    %v2042 = vand.u32 %v2041, 4294901760
    %2043 = vmatpush1.msra.mxu0 %v2042
    %2044 = vmatprep.subr.mxu0 0.0
    %v2045 = vand.u32 %v123, 4294901760
    %v2046 = vsub.f32 %v123, %v2045
    %v2047 = vand.u32 %v2046, 4294901760
    %v2048 = vsub.f32 %v2046, %v2047
    %v2049 = vand.u32 %v2048, 4294901760
    %2050 = vmatpush1.msra.mxu0 %v2049
    %2051 = vmatprep.subr.mxu0 0.0
    %v2052 = vand.u32 %v124, 4294901760
    %v2053 = vsub.f32 %v124, %v2052
    %v2054 = vand.u32 %v2053, 4294901760
    %v2055 = vsub.f32 %v2053, %v2054
    %v2056 = vand.u32 %v2055, 4294901760
    %2057 = vmatpush1.msra.mxu0 %v2056
    %2058 = vmatprep.subr.mxu0 0.0
    %2059 = vmatpush1.msra.mxu0 0.0
    %2060 = vmatprep.subr.mxu0 0.0
    %2061 = vmatpush1.msra.mxu0 0.0
    %2062 = vmatprep.subr.mxu0 0.0
    %2063 = vmatpush1.msra.mxu0 0.0
    %2064 = vmatprep.subr.mxu0 0.0
    %2065 = vmatpush1.msra.mxu0 0.0
    %2066 = vmatprep.subr.mxu0 0.0
    %2067 = vmatpush1.msra.mxu0 0.0
    %2068 = vmatprep.subr.mxu0 0.0
    %2069 = vmatpush1.msra.mxu0 0.0
    %2070 = vmatprep.subr.mxu0 0.0
    %2071 = vmatpush1.msra.mxu0 0.0
    %2072 = vmatprep.subr.mxu0 0.0
    %2073 = vmatpush1.msra.mxu0 0.0
    %2074 = vmatprep.subr.mxu0 0.0
    %2075 = vmatpush1.msra.mxu0 0.0
    %2076 = vmatprep.subr.mxu0 0.0
    %2077 = vmatpush1.msra.mxu0 0.0
    %2078 = vmatprep.subr.mxu0 0.0
    %2079 = vmatpush1.msra.mxu0 0.0
    %2080 = vmatprep.subr.mxu0 0.0
    %2081 = vmatpush1.msra.mxu0 0.0
    %2082 = vmatprep.subr.mxu0 0.0
    %2083 = vmatpush1.msra.mxu0 0.0
    %2084 = vmatprep.subr.mxu0 0.0
    %2085 = vmatpush1.msra.mxu0 0.0
    %2086 = vmatprep.subr.mxu0 0.0
    %2087 = vmatpush1.msra.mxu0 0.0
    %2088 = vmatprep.subr.mxu0 0.0
    %2089 = vmatpush1.msra.mxu0 0.0
    %2090 = vmatprep.mubr.f32.mxu0 0.0
    %v2091 = vand.u32 %v1826, 4294901760
    %2092 = vmatmul.mubr.f32.gmra.mrb[0].mxu0 %v2091
    %v2093 = vpop.f32.mrb[0].mxu0
    %v2094 = vadd.f32 %v1923, %v2093
    %v2095 = vpop.f32.mrb[0].mxu0
    %2096 = vmatprep.mubr.f32.mxu0 0.0
    %v2097 = vand.u32 %v1827, 4294901760
    %2098 = vmatmul.mubr.f32.gmra.mrb[0].mxu0 %v2097
    %v2099 = vpop.f32.mrb[0].mxu0
    %v2100 = vadd.f32 %v1933, %v2099
    %v2101 = vpop.f32.mrb[0].mxu0
    %2102 = vmatprep.mubr.f32.mxu0 0.0
    %v2103 = vand.u32 %v1828, 4294901760
    %2104 = vmatmul.mubr.f32.gmra.mrb[0].mxu0 %v2103
    %v2105 = vpop.f32.mrb[0].mxu0
    %v2106 = vadd.f32 %v1943, %v2105
    %v2107 = vpop.f32.mrb[0].mxu0
    %2108 = vdwg.mxu0
    %2109 = vmatprep.subr.mxu0 0.0
    %v2110 = vand.u32 %v109, 4294901760
    %v2111 = vsub.f32 %v109, %v2110
    %2112 = vmatpush1.msra.mxu0 %v2111
    %2113 = vmatprep.subr.mxu0 0.0
    %v2114 = vand.u32 %v110, 4294901760
    %v2115 = vsub.f32 %v110, %v2114
    %2116 = vmatpush1.msra.mxu0 %v2115
    %2117 = vmatprep.subr.mxu0 0.0
    %v2118 = vand.u32 %v111, 4294901760
    %v2119 = vsub.f32 %v111, %v2118
    %2120 = vmatpush1.msra.mxu0 %v2119
    %2121 = vmatprep.subr.mxu0 0.0
    %v2122 = vand.u32 %v112, 4294901760
    %v2123 = vsub.f32 %v112, %v2122
    %2124 = vmatpush1.msra.mxu0 %v2123
    %2125 = vmatprep.subr.mxu0 0.0
    %v2126 = vand.u32 %v113, 4294901760
    %v2127 = vsub.f32 %v113, %v2126
    %2128 = vmatpush1.msra.mxu0 %v2127
    %2129 = vmatprep.subr.mxu0 0.0
    %v2130 = vand.u32 %v114, 4294901760
    %v2131 = vsub.f32 %v114, %v2130
    %2132 = vmatpush1.msra.mxu0 %v2131
    %2133 = vmatprep.subr.mxu0 0.0
    %v2134 = vand.u32 %v115, 4294901760
    %v2135 = vsub.f32 %v115, %v2134
    %2136 = vmatpush1.msra.mxu0 %v2135
    %2137 = vmatprep.subr.mxu0 0.0
    %v2138 = vand.u32 %v116, 4294901760
    %v2139 = vsub.f32 %v116, %v2138
    %2140 = vmatpush1.msra.mxu0 %v2139
    %2141 = vmatprep.subr.mxu0 0.0
    %v2142 = vand.u32 %v117, 4294901760
    %v2143 = vsub.f32 %v117, %v2142
    %2144 = vmatpush1.msra.mxu0 %v2143
    %2145 = vmatprep.subr.mxu0 0.0
    %v2146 = vand.u32 %v118, 4294901760
    %v2147 = vsub.f32 %v118, %v2146
    %2148 = vmatpush1.msra.mxu0 %v2147
    %2149 = vmatprep.subr.mxu0 0.0
    %v2150 = vand.u32 %v119, 4294901760
    %v2151 = vsub.f32 %v119, %v2150
    %2152 = vmatpush1.msra.mxu0 %v2151
    %2153 = vmatprep.subr.mxu0 0.0
    %v2154 = vand.u32 %v120, 4294901760
    %v2155 = vsub.f32 %v120, %v2154
    %2156 = vmatpush1.msra.mxu0 %v2155
    %2157 = vmatprep.subr.mxu0 0.0
    %v2158 = vand.u32 %v121, 4294901760
    %v2159 = vsub.f32 %v121, %v2158
    %2160 = vmatpush1.msra.mxu0 %v2159
    %2161 = vmatprep.subr.mxu0 0.0
    %v2162 = vand.u32 %v122, 4294901760
    %v2163 = vsub.f32 %v122, %v2162
    %2164 = vmatpush1.msra.mxu0 %v2163
    %2165 = vmatprep.subr.mxu0 0.0
    %v2166 = vand.u32 %v123, 4294901760
    %v2167 = vsub.f32 %v123, %v2166
    %2168 = vmatpush1.msra.mxu0 %v2167
    %2169 = vmatprep.subr.mxu0 0.0
    %v2170 = vand.u32 %v124, 4294901760
    %v2171 = vsub.f32 %v124, %v2170
    %2172 = vmatpush1.msra.mxu0 %v2171
    %2173 = vmatprep.subr.mxu0 0.0
    %2174 = vmatpush1.msra.mxu0 0.0
    %2175 = vmatprep.subr.mxu0 0.0
    %2176 = vmatpush1.msra.mxu0 0.0
    %2177 = vmatprep.subr.mxu0 0.0
    %2178 = vmatpush1.msra.mxu0 0.0
    %2179 = vmatprep.subr.mxu0 0.0
    %2180 = vmatpush1.msra.mxu0 0.0
    %2181 = vmatprep.subr.mxu0 0.0
    %2182 = vmatpush1.msra.mxu0 0.0
    %2183 = vmatprep.subr.mxu0 0.0
    %2184 = vmatpush1.msra.mxu0 0.0
    %2185 = vmatprep.subr.mxu0 0.0
    %2186 = vmatpush1.msra.mxu0 0.0
    %2187 = vmatprep.subr.mxu0 0.0
    %2188 = vmatpush1.msra.mxu0 0.0
    %2189 = vmatprep.subr.mxu0 0.0
    %2190 = vmatpush1.msra.mxu0 0.0
    %2191 = vmatprep.subr.mxu0 0.0
    %2192 = vmatpush1.msra.mxu0 0.0
    %2193 = vmatprep.subr.mxu0 0.0
    %2194 = vmatpush1.msra.mxu0 0.0
    %2195 = vmatprep.subr.mxu0 0.0
    %2196 = vmatpush1.msra.mxu0 0.0
    %2197 = vmatprep.subr.mxu0 0.0
    %2198 = vmatpush1.msra.mxu0 0.0
    %2199 = vmatprep.subr.mxu0 0.0
    %2200 = vmatpush1.msra.mxu0 0.0
    %2201 = vmatprep.subr.mxu0 0.0
    %2202 = vmatpush1.msra.mxu0 0.0
    %2203 = vmatprep.subr.mxu0 0.0
    %2204 = vmatpush1.msra.mxu0 0.0
    %2205 = vmatprep.mubr.f32.mxu0 0.0
    %v2206 = vand.u32 %v1826, 4294901760
    %v2207 = vsub.f32 %v1826, %v2206
    %2208 = vmatmul.mubr.f32.gmra.mrb[0].mxu0 %v2207
    %v2209 = vpop.f32.mrb[0].mxu0
    %v2210 = vadd.f32 %v2094, %v2209
    %v2211 = vpop.f32.mrb[0].mxu0
    %2212 = vmatprep.mubr.f32.mxu0 0.0
    %v2213 = vand.u32 %v1827, 4294901760
    %v2214 = vsub.f32 %v1827, %v2213
    %2215 = vmatmul.mubr.f32.gmra.mrb[0].mxu0 %v2214
    %v2216 = vpop.f32.mrb[0].mxu0
    %v2217 = vadd.f32 %v2100, %v2216
    %v2218 = vpop.f32.mrb[0].mxu0
    %2219 = vmatprep.mubr.f32.mxu0 0.0
    %v2220 = vand.u32 %v1828, 4294901760
    %v2221 = vsub.f32 %v1828, %v2220
    %2222 = vmatmul.mubr.f32.gmra.mrb[0].mxu0 %v2221
    %v2223 = vpop.f32.mrb[0].mxu0
    %v2224 = vadd.f32 %v2106, %v2223
    %v2225 = vpop.f32.mrb[0].mxu0
    %2226 = vdwg.mxu0
    %2227 = vmatprep.subr.mxu0 0.0
    %v2228 = vand.u32 %v109, 4294901760
    %2229 = vmatpush1.msra.mxu0 %v2228
    %2230 = vmatprep.subr.mxu0 0.0
    %v2231 = vand.u32 %v110, 4294901760
    %2232 = vmatpush1.msra.mxu0 %v2231
    %2233 = vmatprep.subr.mxu0 0.0
    %v2234 = vand.u32 %v111, 4294901760
    %2235 = vmatpush1.msra.mxu0 %v2234
    %2236 = vmatprep.subr.mxu0 0.0
    %v2237 = vand.u32 %v112, 4294901760
    %2238 = vmatpush1.msra.mxu0 %v2237
    %2239 = vmatprep.subr.mxu0 0.0
    %v2240 = vand.u32 %v113, 4294901760
    %2241 = vmatpush1.msra.mxu0 %v2240
    %2242 = vmatprep.subr.mxu0 0.0
    %v2243 = vand.u32 %v114, 4294901760
    %2244 = vmatpush1.msra.mxu0 %v2243
    %2245 = vmatprep.subr.mxu0 0.0
    %v2246 = vand.u32 %v115, 4294901760
    %2247 = vmatpush1.msra.mxu0 %v2246
    %2248 = vmatprep.subr.mxu0 0.0
    %v2249 = vand.u32 %v116, 4294901760
    %2250 = vmatpush1.msra.mxu0 %v2249
    %2251 = vmatprep.subr.mxu0 0.0
    %v2252 = vand.u32 %v117, 4294901760
    %2253 = vmatpush1.msra.mxu0 %v2252
    %2254 = vmatprep.subr.mxu0 0.0
    %v2255 = vand.u32 %v118, 4294901760
    %2256 = vmatpush1.msra.mxu0 %v2255
    %2257 = vmatprep.subr.mxu0 0.0
    %v2258 = vand.u32 %v119, 4294901760
    %2259 = vmatpush1.msra.mxu0 %v2258
    %2260 = vmatprep.subr.mxu0 0.0
    %v2261 = vand.u32 %v120, 4294901760
    %2262 = vmatpush1.msra.mxu0 %v2261
    %2263 = vmatprep.subr.mxu0 0.0
    %v2264 = vand.u32 %v121, 4294901760
    %2265 = vmatpush1.msra.mxu0 %v2264
    %2266 = vmatprep.subr.mxu0 0.0
    %v2267 = vand.u32 %v122, 4294901760
    %2268 = vmatpush1.msra.mxu0 %v2267
    %2269 = vmatprep.subr.mxu0 0.0
    %v2270 = vand.u32 %v123, 4294901760
    %2271 = vmatpush1.msra.mxu0 %v2270
    %2272 = vmatprep.subr.mxu0 0.0
    %v2273 = vand.u32 %v124, 4294901760
    %2274 = vmatpush1.msra.mxu0 %v2273
    %2275 = vmatprep.subr.mxu0 0.0
    %2276 = vmatpush1.msra.mxu0 0.0
    %2277 = vmatprep.subr.mxu0 0.0
    %2278 = vmatpush1.msra.mxu0 0.0
    %2279 = vmatprep.subr.mxu0 0.0
    %2280 = vmatpush1.msra.mxu0 0.0
    %2281 = vmatprep.subr.mxu0 0.0
    %2282 = vmatpush1.msra.mxu0 0.0
    %2283 = vmatprep.subr.mxu0 0.0
    %2284 = vmatpush1.msra.mxu0 0.0
    %2285 = vmatprep.subr.mxu0 0.0
    %2286 = vmatpush1.msra.mxu0 0.0
    %2287 = vmatprep.subr.mxu0 0.0
    %2288 = vmatpush1.msra.mxu0 0.0
    %2289 = vmatprep.subr.mxu0 0.0
    %2290 = vmatpush1.msra.mxu0 0.0
    %2291 = vmatprep.subr.mxu0 0.0
    %2292 = vmatpush1.msra.mxu0 0.0
    %2293 = vmatprep.subr.mxu0 0.0
    %2294 = vmatpush1.msra.mxu0 0.0
    %2295 = vmatprep.subr.mxu0 0.0
    %2296 = vmatpush1.msra.mxu0 0.0
    %2297 = vmatprep.subr.mxu0 0.0
    %2298 = vmatpush1.msra.mxu0 0.0
    %2299 = vmatprep.subr.mxu0 0.0
    %2300 = vmatpush1.msra.mxu0 0.0
    %2301 = vmatprep.subr.mxu0 0.0
    %2302 = vmatpush1.msra.mxu0 0.0
    %2303 = vmatprep.subr.mxu0 0.0
    %2304 = vmatpush1.msra.mxu0 0.0
    %2305 = vmatprep.subr.mxu0 0.0
    %2306 = vmatpush1.msra.mxu0 0.0
    %2307 = vmatprep.mubr.f32.mxu0 0.0
    %v2308 = vand.u32 %v1826, 4294901760
    %v2309 = vsub.f32 %v1826, %v2308
    %v2310 = vand.u32 %v2309, 4294901760
    %2311 = vmatmul.mubr.f32.gmra.mrb[0].mxu0 %v2310
    %v2312 = vpop.f32.mrb[0].mxu0
    %v2313 = vadd.f32 %v2210, %v2312
    %v2314 = vpop.f32.mrb[0].mxu0
    %2315 = vmatprep.mubr.f32.mxu0 0.0
    %v2316 = vand.u32 %v1827, 4294901760
    %v2317 = vsub.f32 %v1827, %v2316
    %v2318 = vand.u32 %v2317, 4294901760
    %2319 = vmatmul.mubr.f32.gmra.mrb[0].mxu0 %v2318
    %v2320 = vpop.f32.mrb[0].mxu0
    %v2321 = vadd.f32 %v2217, %v2320
    %v2322 = vpop.f32.mrb[0].mxu0
    %2323 = vmatprep.mubr.f32.mxu0 0.0
    %v2324 = vand.u32 %v1828, 4294901760
    %v2325 = vsub.f32 %v1828, %v2324
    %v2326 = vand.u32 %v2325, 4294901760
    %2327 = vmatmul.mubr.f32.gmra.mrb[0].mxu0 %v2326
    %v2328 = vpop.f32.mrb[0].mxu0
    %v2329 = vadd.f32 %v2224, %v2328
    %v2330 = vpop.f32.mrb[0].mxu0
    %2331 = vdwg.mxu0
    %2332 = vmatprep.subr.mxu0 0.0
    %v2333 = vand.u32 %v109, 4294901760
    %v2334 = vsub.f32 %v109, %v2333
    %v2335 = vand.u32 %v2334, 4294901760
    %2336 = vmatpush1.msra.mxu0 %v2335
    %2337 = vmatprep.subr.mxu0 0.0
    %v2338 = vand.u32 %v110, 4294901760
    %v2339 = vsub.f32 %v110, %v2338
    %v2340 = vand.u32 %v2339, 4294901760
    %2341 = vmatpush1.msra.mxu0 %v2340
    %2342 = vmatprep.subr.mxu0 0.0
    %v2343 = vand.u32 %v111, 4294901760
    %v2344 = vsub.f32 %v111, %v2343
    %v2345 = vand.u32 %v2344, 4294901760
    %2346 = vmatpush1.msra.mxu0 %v2345
    %2347 = vmatprep.subr.mxu0 0.0
    %v2348 = vand.u32 %v112, 4294901760
    %v2349 = vsub.f32 %v112, %v2348
    %v2350 = vand.u32 %v2349, 4294901760
    %2351 = vmatpush1.msra.mxu0 %v2350
    %2352 = vmatprep.subr.mxu0 0.0
    %v2353 = vand.u32 %v113, 4294901760
    %v2354 = vsub.f32 %v113, %v2353
    %v2355 = vand.u32 %v2354, 4294901760
    %2356 = vmatpush1.msra.mxu0 %v2355
    %2357 = vmatprep.subr.mxu0 0.0
    %v2358 = vand.u32 %v114, 4294901760
    %v2359 = vsub.f32 %v114, %v2358
    %v2360 = vand.u32 %v2359, 4294901760
    %2361 = vmatpush1.msra.mxu0 %v2360
    %2362 = vmatprep.subr.mxu0 0.0
    %v2363 = vand.u32 %v115, 4294901760
    %v2364 = vsub.f32 %v115, %v2363
    %v2365 = vand.u32 %v2364, 4294901760
    %2366 = vmatpush1.msra.mxu0 %v2365
    %2367 = vmatprep.subr.mxu0 0.0
    %v2368 = vand.u32 %v116, 4294901760
    %v2369 = vsub.f32 %v116, %v2368
    %v2370 = vand.u32 %v2369, 4294901760
    %2371 = vmatpush1.msra.mxu0 %v2370
    %2372 = vmatprep.subr.mxu0 0.0
    %v2373 = vand.u32 %v117, 4294901760
    %v2374 = vsub.f32 %v117, %v2373
    %v2375 = vand.u32 %v2374, 4294901760
    %2376 = vmatpush1.msra.mxu0 %v2375
    %2377 = vmatprep.subr.mxu0 0.0
    %v2378 = vand.u32 %v118, 4294901760
    %v2379 = vsub.f32 %v118, %v2378
    %v2380 = vand.u32 %v2379, 4294901760
    %2381 = vmatpush1.msra.mxu0 %v2380
    %2382 = vmatprep.subr.mxu0 0.0
    %v2383 = vand.u32 %v119, 4294901760
    %v2384 = vsub.f32 %v119, %v2383
    %v2385 = vand.u32 %v2384, 4294901760
    %2386 = vmatpush1.msra.mxu0 %v2385
    %2387 = vmatprep.subr.mxu0 0.0
    %v2388 = vand.u32 %v120, 4294901760
    %v2389 = vsub.f32 %v120, %v2388
    %v2390 = vand.u32 %v2389, 4294901760
    %2391 = vmatpush1.msra.mxu0 %v2390
    %2392 = vmatprep.subr.mxu0 0.0
    %v2393 = vand.u32 %v121, 4294901760
    %v2394 = vsub.f32 %v121, %v2393
    %v2395 = vand.u32 %v2394, 4294901760
    %2396 = vmatpush1.msra.mxu0 %v2395
    %2397 = vmatprep.subr.mxu0 0.0
    %v2398 = vand.u32 %v122, 4294901760
    %v2399 = vsub.f32 %v122, %v2398
    %v2400 = vand.u32 %v2399, 4294901760
    %2401 = vmatpush1.msra.mxu0 %v2400
    %2402 = vmatprep.subr.mxu0 0.0
    %v2403 = vand.u32 %v123, 4294901760
    %v2404 = vsub.f32 %v123, %v2403
    %v2405 = vand.u32 %v2404, 4294901760
    %2406 = vmatpush1.msra.mxu0 %v2405
    %2407 = vmatprep.subr.mxu0 0.0
    %v2408 = vand.u32 %v124, 4294901760
    %v2409 = vsub.f32 %v124, %v2408
    %v2410 = vand.u32 %v2409, 4294901760
    %2411 = vmatpush1.msra.mxu0 %v2410
    %2412 = vmatprep.subr.mxu0 0.0
    %2413 = vmatpush1.msra.mxu0 0.0
    %2414 = vmatprep.subr.mxu0 0.0
    %2415 = vmatpush1.msra.mxu0 0.0
    %2416 = vmatprep.subr.mxu0 0.0
    %2417 = vmatpush1.msra.mxu0 0.0
    %2418 = vmatprep.subr.mxu0 0.0
    %2419 = vmatpush1.msra.mxu0 0.0
    %2420 = vmatprep.subr.mxu0 0.0
    %2421 = vmatpush1.msra.mxu0 0.0
    %2422 = vmatprep.subr.mxu0 0.0
    %2423 = vmatpush1.msra.mxu0 0.0
    %2424 = vmatprep.subr.mxu0 0.0
    %2425 = vmatpush1.msra.mxu0 0.0
    %2426 = vmatprep.subr.mxu0 0.0
    %2427 = vmatpush1.msra.mxu0 0.0
    %2428 = vmatprep.subr.mxu0 0.0
    %2429 = vmatpush1.msra.mxu0 0.0
    %2430 = vmatprep.subr.mxu0 0.0
    %2431 = vmatpush1.msra.mxu0 0.0
    %2432 = vmatprep.subr.mxu0 0.0
    %2433 = vmatpush1.msra.mxu0 0.0
    %2434 = vmatprep.subr.mxu0 0.0
    %2435 = vmatpush1.msra.mxu0 0.0
    %2436 = vmatprep.subr.mxu0 0.0
    %2437 = vmatpush1.msra.mxu0 0.0
    %2438 = vmatprep.subr.mxu0 0.0
    %2439 = vmatpush1.msra.mxu0 0.0
    %2440 = vmatprep.subr.mxu0 0.0
    %2441 = vmatpush1.msra.mxu0 0.0
    %2442 = vmatprep.subr.mxu0 0.0
    %2443 = vmatpush1.msra.mxu0 0.0
    %2444 = vmatprep.mubr.f32.mxu0 0.0
    %v2445 = vand.u32 %v1826, 4294901760
    %2446 = vmatmul.mubr.f32.gmra.mrb[0].mxu0 %v2445
    %v2447 = vpop.f32.mrb[0].mxu0
    %v2448 = vadd.f32 %v2313, %v2447
    %v2449 = vpop.f32.mrb[0].mxu0
    %2450 = vmatprep.mubr.f32.mxu0 0.0
    %v2451 = vand.u32 %v1827, 4294901760
    %2452 = vmatmul.mubr.f32.gmra.mrb[0].mxu0 %v2451
    %v2453 = vpop.f32.mrb[0].mxu0
    %v2454 = vadd.f32 %v2321, %v2453
    %v2455 = vpop.f32.mrb[0].mxu0
    %2456 = vmatprep.mubr.f32.mxu0 0.0
    %v2457 = vand.u32 %v1828, 4294901760
    %2458 = vmatmul.mubr.f32.gmra.mrb[0].mxu0 %v2457
    %v2459 = vpop.f32.mrb[0].mxu0
    %v2460 = vadd.f32 %v2329, %v2459
    %v2461 = vpop.f32.mrb[0].mxu0
    %2462 = vdwg.mxu0
    %2463 = vmatprep.subr.mxu0 0.0
    %v2464 = vand.u32 %v109, 4294901760
    %2465 = vmatpush1.msra.mxu0 %v2464
    %2466 = vmatprep.subr.mxu0 0.0
    %v2467 = vand.u32 %v110, 4294901760
    %2468 = vmatpush1.msra.mxu0 %v2467
    %2469 = vmatprep.subr.mxu0 0.0
    %v2470 = vand.u32 %v111, 4294901760
    %2471 = vmatpush1.msra.mxu0 %v2470
    %2472 = vmatprep.subr.mxu0 0.0
    %v2473 = vand.u32 %v112, 4294901760
    %2474 = vmatpush1.msra.mxu0 %v2473
    %2475 = vmatprep.subr.mxu0 0.0
    %v2476 = vand.u32 %v113, 4294901760
    %2477 = vmatpush1.msra.mxu0 %v2476
    %2478 = vmatprep.subr.mxu0 0.0
    %v2479 = vand.u32 %v114, 4294901760
    %2480 = vmatpush1.msra.mxu0 %v2479
    %2481 = vmatprep.subr.mxu0 0.0
    %v2482 = vand.u32 %v115, 4294901760
    %2483 = vmatpush1.msra.mxu0 %v2482
    %2484 = vmatprep.subr.mxu0 0.0
    %v2485 = vand.u32 %v116, 4294901760
    %2486 = vmatpush1.msra.mxu0 %v2485
    %2487 = vmatprep.subr.mxu0 0.0
    %v2488 = vand.u32 %v117, 4294901760
    %2489 = vmatpush1.msra.mxu0 %v2488
    %2490 = vmatprep.subr.mxu0 0.0
    %v2491 = vand.u32 %v118, 4294901760
    %2492 = vmatpush1.msra.mxu0 %v2491
    %2493 = vmatprep.subr.mxu0 0.0
    %v2494 = vand.u32 %v119, 4294901760
    %2495 = vmatpush1.msra.mxu0 %v2494
    %2496 = vmatprep.subr.mxu0 0.0
    %v2497 = vand.u32 %v120, 4294901760
    %2498 = vmatpush1.msra.mxu0 %v2497
    %2499 = vmatprep.subr.mxu0 0.0
    %v2500 = vand.u32 %v121, 4294901760
    %2501 = vmatpush1.msra.mxu0 %v2500
    %2502 = vmatprep.subr.mxu0 0.0
    %v2503 = vand.u32 %v122, 4294901760
    %2504 = vmatpush1.msra.mxu0 %v2503
    %2505 = vmatprep.subr.mxu0 0.0
    %v2506 = vand.u32 %v123, 4294901760
    %2507 = vmatpush1.msra.mxu0 %v2506
    %2508 = vmatprep.subr.mxu0 0.0
    %v2509 = vand.u32 %v124, 4294901760
    %2510 = vmatpush1.msra.mxu0 %v2509
    %2511 = vmatprep.subr.mxu0 0.0
    %2512 = vmatpush1.msra.mxu0 0.0
    %2513 = vmatprep.subr.mxu0 0.0
    %2514 = vmatpush1.msra.mxu0 0.0
    %2515 = vmatprep.subr.mxu0 0.0
    %2516 = vmatpush1.msra.mxu0 0.0
    %2517 = vmatprep.subr.mxu0 0.0
    %2518 = vmatpush1.msra.mxu0 0.0
    %2519 = vmatprep.subr.mxu0 0.0
    %2520 = vmatpush1.msra.mxu0 0.0
    %2521 = vmatprep.subr.mxu0 0.0
    %2522 = vmatpush1.msra.mxu0 0.0
    %2523 = vmatprep.subr.mxu0 0.0
    %2524 = vmatpush1.msra.mxu0 0.0
    %2525 = vmatprep.subr.mxu0 0.0
    %2526 = vmatpush1.msra.mxu0 0.0
    %2527 = vmatprep.subr.mxu0 0.0
    %2528 = vmatpush1.msra.mxu0 0.0
    %2529 = vmatprep.subr.mxu0 0.0
    %2530 = vmatpush1.msra.mxu0 0.0
    %2531 = vmatprep.subr.mxu0 0.0
    %2532 = vmatpush1.msra.mxu0 0.0
    %2533 = vmatprep.subr.mxu0 0.0
    %2534 = vmatpush1.msra.mxu0 0.0
    %2535 = vmatprep.subr.mxu0 0.0
    %2536 = vmatpush1.msra.mxu0 0.0
    %2537 = vmatprep.subr.mxu0 0.0
    %2538 = vmatpush1.msra.mxu0 0.0
    %2539 = vmatprep.subr.mxu0 0.0
    %2540 = vmatpush1.msra.mxu0 0.0
    %2541 = vmatprep.subr.mxu0 0.0
    %2542 = vmatpush1.msra.mxu0 0.0
    %2543 = vmatprep.mubr.f32.mxu0 0.0
    %v2544 = vand.u32 %v1826, 4294901760
    %2545 = vmatmul.mubr.f32.gmra.mrb[0].mxu0 %v2544
    %v2546 = vpop.f32.mrb[0].mxu0
    %v2547 = vadd.f32 %v2448, %v2546
    %v2548 = vpop.f32.mrb[0].mxu0
    %2549 = vmatprep.mubr.f32.mxu0 0.0
    %v2550 = vand.u32 %v1827, 4294901760
    %2551 = vmatmul.mubr.f32.gmra.mrb[0].mxu0 %v2550
    %v2552 = vpop.f32.mrb[0].mxu0
    %v2553 = vadd.f32 %v2454, %v2552
    %v2554 = vpop.f32.mrb[0].mxu0
    %2555 = vmatprep.mubr.f32.mxu0 0.0
    %v2556 = vand.u32 %v1828, 4294901760
    %2557 = vmatmul.mubr.f32.gmra.mrb[0].mxu0 %v2556
    %v2558 = vpop.f32.mrb[0].mxu0
    %v2559 = vadd.f32 %v2460, %v2558
    %v2560 = vpop.f32.mrb[0].mxu0
    %2561 = vdwg.mxu0
    %v2562 = vmul.f32 %v2547, 0.5
    %v2563 = vmul.f32 %v2553, 0.5
    %v2564 = vmul.f32 %v2559, 0.5
    %v2565 = vtanh.pop %v2562
    %v2566 = vtanh.pop %v2563
    %v2567 = vtanh.pop %v2564
    %v2568 = vmul.f32 %v2565, 0.5
    %v2569 = vmul.f32 %v2566, 0.5
    %v2570 = vmul.f32 %v2567, 0.5
    %v2571 = vadd.f32 %v2568, 0.5
    %v2572 = vadd.f32 %v2569, 0.5
    %v2573 = vadd.f32 %v2570, 0.5
    %v2574 = vmul.f32 %v1052, 0.001
    %v2575 = vadd.f32 %v2571, %v2574
    %v2576 = vadd.f32 %v2572, 0.0
    %v2577 = vadd.f32 %v2573, 0.001
    %v2578 = vsub.f32 %v2575, %v2576
    %v2579 = vsub.f32 %v2577, %v2576
    %v2580 = vrcp.pop %v2579
    %v2581 = vmul.f32 %v2578, %v2580
    %2582 = vst [vmem:[#allocation10] sm:$0xff] %v2581
    // Predicated region
    $region54: #{tpu_custom_call.1} parent=1 // pred_check
      _
    $region55: #{tpu_custom_call.1} parent=1 // pred_check_branch
      %2584 = sbr.rel (0) target = $region57
    $region56: #{tpu_custom_call.1} parent=1 // pred_region
      %s2586 = ssub.s32 128, 128
      %2587 = vsyncadd [#allocation4], %s2586
      %s2589 = sshll.u32 [#allocation10], 4
      %s2590 = int_to_ptr.vmem [resolvable:$true] %s2589
      %2592 = dma.vmem_to_hbm [thread:$0]  %s2590, 128, %s9, [#allocation4]
    $region57: #{tpu_custom_call.1} parent=1 // pred_fallthru
      _
    // Predicated region
    $region58: #{tpu_custom_call.1} parent=1 // pred_check
      _
    $region59: #{tpu_custom_call.1} parent=1 // pred_check_branch
      %2594 = sbr.rel (0) target = $region61
    $region60: #{tpu_custom_call.1} parent=1 // pred_region
      %2595 = dma.done [#allocation4], 128
    $region61: #{tpu_custom_call.1} parent=1 // pred_fallthru
      _
    %2596 = vsyncpa [#allocation3], 1
    %2597 = vsyncpa [#allocation6], 1
    %2598 = vsyncpa [#allocation9], 1
    %2599 = vsyncpa [#allocation4], 1

</llo_original>
